<compile_context>
chip_gen: v7x
topology: tpu7x:2x2x1
jax: 0.10.0
libtpu: 0.0.40
codegen_flags: <defaults>
</compile_context>

<pallas_src>
import functools

import jax
import jax.numpy as jnp
from jax.experimental import pallas as pl
from jax.experimental.pallas import tpu as pltpu


# ----------------------------- Pallas kernel ------------------------------- #

def _make_fused_kernel(N, C_out, P, offsets, count):
    """Fused conv (kh*kw accumulated matmuls) + BN(batch stats) + ReLU kernel."""
    inv_count = 1.0 / float(count)

    def kernel(x_ref, w_ref, g_ref, b_ref, m_ref, o_ref):
        # x_ref: (N, Kc, Qp)        bf16  flattened padded input (read once)
        # w_ref: (kh*kw, C_out, Kc) bf16  per-tap weights
        # g_ref: (C_out, 1)         f32   BN gamma
        # b_ref: (C_out, 1)         f32   BN beta
        # m_ref: (1, P)             f32   valid-column mask ((q % Wp) < Wo)
        # o_ref: (N, C_out, P)      f32   lane-dense output (NCHW after free reshape)
        mask = m_ref[...]

        # ---- conv: kh*kw accumulated MXU matmuls over shifted flat slabs ----
        ys = []
        for n in range(N):
            acc = jnp.zeros((C_out, P), dtype=jnp.float32)
            for t, off in enumerate(offsets):
                w_t = w_ref[t]                       # (C_out, Kc) bf16
                slab = x_ref[n, :, pl.ds(off, P)]    # (Kc, P)     bf16
                acc = acc + jnp.dot(w_t, slab, preferred_element_type=jnp.float32)
            ys.append(acc)

        # ---- BN batch statistics: two-pass, masked to valid columns, all f32 ----
        s = jnp.zeros((C_out, 1), dtype=jnp.float32)
        for n in range(N):
            s = s + jnp.sum(ys[n] * mask, axis=1, keepdims=True)
        mean = s * inv_count

        v = jnp.zeros((C_out, 1), dtype=jnp.float32)
        for n in range(N):
            d = (ys[n] - mean) * mask
            v = v + jnp.sum(d * d, axis=1, keepdims=True)
        var = v * inv_count                          # biased var (PyTorch BN norm)

        inv_std = jax.lax.rsqrt(var + 1e-5)          # EUP
        scale = g_ref[...] * inv_std                 # (C_out, 1)
        shift = b_ref[...] - mean * scale            # (C_out, 1)

        # ---- affine + ReLU, lane-dense stores ----
        for n in range(N):
            o_ref[n] = jnp.maximum(ys[n] * scale + shift, 0.0)

    return kernel


# ------------------------------- wrapper ----------------------------------- #

@functools.partial(jax.jit, static_argnames=("stride", "padding"))
def my_cnn_encoder_forward(x_nchw, weight, bias, gamma, beta, *, stride, padding):
    # `bias` is accepted for interface fidelity but is mathematically cancelled by
    # the training-mode BatchNorm mean subtraction, so it never reaches the kernel.
    del bias

    N, C_in, H, W = x_nchw.shape
    C_out, _, kh, kw = weight.shape
    # TODO(synk): the fused flat-slab formulation assumes stride == 1 (the module's
    # config here); strided convs need a strided slab extraction / index_map.
    assert stride == 1, "fused Pallas path implemented for stride=1"

    Hp, Wp = H + 2 * padding, W + 2 * padding
    Ho, Wo = Hp - kh + 1, Wp - kw + 1
    P = Ho * Wp                        # overcomputed cols/image (garbage where q % Wp >= Wo)
    Kc = ((C_in + 7) // 8) * 8         # contraction dim padded to 8 sublanes

    # --- input: ONE pad + free contiguous reshape + bf16 cast (no im2col) ---
    extra_row = 1 if kw > 1 else 0     # keeps the last tap's slab in-bounds
    x_p = jnp.pad(x_nchw, ((0, 0), (0, Kc - C_in),
                           (padding, padding + extra_row), (padding, padding)))
    Qp = (Hp + extra_row) * Wp
    x_flat = x_p.reshape(N, Kc, Qp).astype(jnp.bfloat16)

    # --- tiny weight rearrangement: (C_out, C_in, kh, kw) -> (kh*kw, C_out, Kc) ---
    w_p = jnp.pad(weight, ((0, 0), (0, Kc - C_in), (0, 0), (0, 0)))
    w_taps = jnp.transpose(w_p, (2, 3, 0, 1)).reshape(kh * kw, C_out, Kc)
    w_taps = w_taps.astype(jnp.bfloat16)
    offsets = tuple(di * Wp + dj for di in range(kh) for dj in range(kw))

    g2 = gamma.reshape(C_out, 1).astype(jnp.float32)
    b2 = beta.reshape(C_out, 1).astype(jnp.float32)
    mask = (jnp.arange(P, dtype=jnp.int32) % Wp < Wo).astype(jnp.float32).reshape(1, P)

    kernel = _make_fused_kernel(N, C_out, P, offsets, count=N * Ho * Wo)

    vmem = pl.BlockSpec(memory_space=pltpu.MemorySpace.VMEM)
    out_flat = pl.pallas_call(
        kernel,
        out_shape=jax.ShapeDtypeStruct((N, C_out, P), jnp.float32),
        in_specs=[vmem, vmem, vmem, vmem, vmem],
        out_specs=vmem,
    )(x_flat, w_taps, g2, b2, mask)

    # --- (N, C_out, Ho*Wp) -> NCHW: free reshape + cheap width slice, NO transpose ---
    # TODO(synk): at production sizes eliminate this slice with Wo-aligned tiling or
    # in-kernel masked stores.
    out = out_flat.reshape(N, C_out, Ho, Wp)[:, :, :, :Wo]
    return out


# -------------------------------- main -------------------------------------- #

if __name__ == "__main__":
    # module config (small, consistent with the PyTorch module)
    in_channels, out_channels = 4, 8
    kernel_size, stride, padding = 3, 1, 1
    N, H, W = 2, 16, 16

    key = jax.random.PRNGKey(0)
    kx, kw_, kb = jax.random.split(key, 3)

    x = jax.random.normal(kx, (N, in_channels, H, W), dtype=jnp.float32)

    # deterministic parameter init (Conv2d-like scale); BatchNorm2d defaults:
    # gamma=1, beta=0; training-mode normalization uses batch statistics.
    fan_in = in_channels * kernel_size * kernel_size
    bound = 1.0 / jnp.sqrt(fan_in)
    weight = jax.random.uniform(
        kw_, (out_channels, in_channels, kernel_size, kernel_size),
        minval=-bound, maxval=bound, dtype=jnp.float32)
    bias = jax.random.uniform(
        kb, (out_channels,), minval=-bound, maxval=bound, dtype=jnp.float32)
    gamma = jnp.ones((out_channels,), dtype=jnp.float32)
    beta = jnp.zeros((out_channels,), dtype=jnp.float32)

    out = my_cnn_encoder_forward(x, weight, bias, gamma, beta,
                                 stride=stride, padding=padding)
    out = jax.block_until_ready(out)
    assert out.shape == (N, out_channels, H, W)
    assert bool(jnp.all(out >= 0.0))  # ReLU sanity

    # Pure-JAX f32 reference: Conv2d -> training-mode BatchNorm2d -> ReLU.
    conv = jax.lax.conv_general_dilated(
        x, weight, window_strides=(stride, stride),
        padding=((padding, padding), (padding, padding)),
        dimension_numbers=("NCHW", "OIHW", "NCHW")) + bias.reshape(1, -1, 1, 1)
    mu = conv.mean(axis=(0, 2, 3), keepdims=True)
    var = conv.var(axis=(0, 2, 3), keepdims=True)          # biased variance
    ref = jnp.maximum((conv - mu) * jax.lax.rsqrt(var + 1e-5)
                      * gamma.reshape(1, -1, 1, 1) + beta.reshape(1, -1, 1, 1), 0.0)
    err = float(jnp.max(jnp.abs(out - ref)))
    assert err < 1e-1, f"mismatch vs reference: {err}"    # bf16-MXU tolerance

    print("KERNEL_OK")
</pallas_src>

<mosaic_0001>
module attributes {stable_mosaic.version = 11 : i64} {
  func.func @kernel(%arg0: memref<2x8x342xbf16, #tpu.memory_space<vmem>>, %arg1: memref<9x8x8xbf16, #tpu.memory_space<vmem>>, %arg2: memref<8x1xf32, #tpu.memory_space<vmem>>, %arg3: memref<8x1xf32, #tpu.memory_space<vmem>>, %arg4: memref<1x288xf32, #tpu.memory_space<vmem>>, %arg5: memref<2x8x288xf32, #tpu.memory_space<vmem>>) attributes {dimension_semantics = [], scalar_prefetch = 0 : i64, scratch_operands = 0 : i64, tpu.core_type = #tpu.core_type<tc>} {
    %c0 = arith.constant 0 : index
    %c0_0 = arith.constant 0 : index
    %0 = vector.load %arg4[%c0, %c0_0] : memref<1x288xf32, #tpu.memory_space<vmem>>, vector<1x288xf32>
    %cst = arith.constant 0.000000e+00 : f32
    %1 = vector.broadcast %cst : f32 to vector<8x288xf32>
    %c0_1 = arith.constant 0 : index
    %c0_2 = arith.constant 0 : index
    %c0_3 = arith.constant 0 : index
    %2 = vector.load %arg1[%c0_1, %c0_2, %c0_3] : memref<9x8x8xbf16, #tpu.memory_space<vmem>>, vector<1x8x8xbf16>
    %3 = vector.shape_cast %2 : vector<1x8x8xbf16> to vector<8x8xbf16>
    %c0_4 = arith.constant 0 : index
    %c0_5 = arith.constant 0 : index
    %c0_6 = arith.constant 0 : index
    %4 = vector.load %arg0[%c0_4, %c0_5, %c0_6] : memref<2x8x342xbf16, #tpu.memory_space<vmem>>, vector<1x8x288xbf16>
    %5 = vector.shape_cast %4 : vector<1x8x288xbf16> to vector<8x288xbf16>
    %cst_7 = arith.constant dense<0.000000e+00> : vector<8x288xf32>
    %6 = tpu.matmul %3, %5, %cst_7 {dimension_numbers = #tpu.dot_dimension_numbers<[1], [0], [0], [1], [0, 0, 1, 1], [], []>} : vector<8x8xbf16>, vector<8x288xbf16>, vector<8x288xf32> -> vector<8x288xf32>
    %7 = arith.addf %1, %6 : vector<8x288xf32>
    %c1 = arith.constant 1 : index
    %c0_8 = arith.constant 0 : index
    %c0_9 = arith.constant 0 : index
    %8 = vector.load %arg1[%c1, %c0_8, %c0_9] : memref<9x8x8xbf16, #tpu.memory_space<vmem>>, vector<1x8x8xbf16>
    %9 = vector.shape_cast %8 : vector<1x8x8xbf16> to vector<8x8xbf16>
    %c0_10 = arith.constant 0 : index
    %c0_11 = arith.constant 0 : index
    %c1_12 = arith.constant 1 : index
    %10 = vector.load %arg0[%c0_10, %c0_11, %c1_12] : memref<2x8x342xbf16, #tpu.memory_space<vmem>>, vector<1x8x288xbf16>
    %11 = vector.shape_cast %10 : vector<1x8x288xbf16> to vector<8x288xbf16>
    %cst_13 = arith.constant dense<0.000000e+00> : vector<8x288xf32>
    %12 = tpu.matmul %9, %11, %cst_13 {dimension_numbers = #tpu.dot_dimension_numbers<[1], [0], [0], [1], [0, 0, 1, 1], [], []>} : vector<8x8xbf16>, vector<8x288xbf16>, vector<8x288xf32> -> vector<8x288xf32>
    %13 = arith.addf %7, %12 : vector<8x288xf32>
    %c2 = arith.constant 2 : index
    %c0_14 = arith.constant 0 : index
    %c0_15 = arith.constant 0 : index
    %14 = vector.load %arg1[%c2, %c0_14, %c0_15] : memref<9x8x8xbf16, #tpu.memory_space<vmem>>, vector<1x8x8xbf16>
    %15 = vector.shape_cast %14 : vector<1x8x8xbf16> to vector<8x8xbf16>
    %c0_16 = arith.constant 0 : index
    %c0_17 = arith.constant 0 : index
    %c2_18 = arith.constant 2 : index
    %16 = vector.load %arg0[%c0_16, %c0_17, %c2_18] : memref<2x8x342xbf16, #tpu.memory_space<vmem>>, vector<1x8x288xbf16>
    %17 = vector.shape_cast %16 : vector<1x8x288xbf16> to vector<8x288xbf16>
    %cst_19 = arith.constant dense<0.000000e+00> : vector<8x288xf32>
    %18 = tpu.matmul %15, %17, %cst_19 {dimension_numbers = #tpu.dot_dimension_numbers<[1], [0], [0], [1], [0, 0, 1, 1], [], []>} : vector<8x8xbf16>, vector<8x288xbf16>, vector<8x288xf32> -> vector<8x288xf32>
    %19 = arith.addf %13, %18 : vector<8x288xf32>
    %c3 = arith.constant 3 : index
    %c0_20 = arith.constant 0 : index
    %c0_21 = arith.constant 0 : index
    %20 = vector.load %arg1[%c3, %c0_20, %c0_21] : memref<9x8x8xbf16, #tpu.memory_space<vmem>>, vector<1x8x8xbf16>
    %21 = vector.shape_cast %20 : vector<1x8x8xbf16> to vector<8x8xbf16>
    %c0_22 = arith.constant 0 : index
    %c0_23 = arith.constant 0 : index
    %c18 = arith.constant 18 : index
    %22 = vector.load %arg0[%c0_22, %c0_23, %c18] : memref<2x8x342xbf16, #tpu.memory_space<vmem>>, vector<1x8x288xbf16>
    %23 = vector.shape_cast %22 : vector<1x8x288xbf16> to vector<8x288xbf16>
    %cst_24 = arith.constant dense<0.000000e+00> : vector<8x288xf32>
    %24 = tpu.matmul %21, %23, %cst_24 {dimension_numbers = #tpu.dot_dimension_numbers<[1], [0], [0], [1], [0, 0, 1, 1], [], []>} : vector<8x8xbf16>, vector<8x288xbf16>, vector<8x288xf32> -> vector<8x288xf32>
    %25 = arith.addf %19, %24 : vector<8x288xf32>
    %c4 = arith.constant 4 : index
    %c0_25 = arith.constant 0 : index
    %c0_26 = arith.constant 0 : index
    %26 = vector.load %arg1[%c4, %c0_25, %c0_26] : memref<9x8x8xbf16, #tpu.memory_space<vmem>>, vector<1x8x8xbf16>
    %27 = vector.shape_cast %26 : vector<1x8x8xbf16> to vector<8x8xbf16>
    %c0_27 = arith.constant 0 : index
    %c0_28 = arith.constant 0 : index
    %c19 = arith.constant 19 : index
    %28 = vector.load %arg0[%c0_27, %c0_28, %c19] : memref<2x8x342xbf16, #tpu.memory_space<vmem>>, vector<1x8x288xbf16>
    %29 = vector.shape_cast %28 : vector<1x8x288xbf16> to vector<8x288xbf16>
    %cst_29 = arith.constant dense<0.000000e+00> : vector<8x288xf32>
    %30 = tpu.matmul %27, %29, %cst_29 {dimension_numbers = #tpu.dot_dimension_numbers<[1], [0], [0], [1], [0, 0, 1, 1], [], []>} : vector<8x8xbf16>, vector<8x288xbf16>, vector<8x288xf32> -> vector<8x288xf32>
    %31 = arith.addf %25, %30 : vector<8x288xf32>
    %c5 = arith.constant 5 : index
    %c0_30 = arith.constant 0 : index
    %c0_31 = arith.constant 0 : index
    %32 = vector.load %arg1[%c5, %c0_30, %c0_31] : memref<9x8x8xbf16, #tpu.memory_space<vmem>>, vector<1x8x8xbf16>
    %33 = vector.shape_cast %32 : vector<1x8x8xbf16> to vector<8x8xbf16>
    %c0_32 = arith.constant 0 : index
    %c0_33 = arith.constant 0 : index
    %c20 = arith.constant 20 : index
    %34 = vector.load %arg0[%c0_32, %c0_33, %c20] : memref<2x8x342xbf16, #tpu.memory_space<vmem>>, vector<1x8x288xbf16>
    %35 = vector.shape_cast %34 : vector<1x8x288xbf16> to vector<8x288xbf16>
    %cst_34 = arith.constant dense<0.000000e+00> : vector<8x288xf32>
    %36 = tpu.matmul %33, %35, %cst_34 {dimension_numbers = #tpu.dot_dimension_numbers<[1], [0], [0], [1], [0, 0, 1, 1], [], []>} : vector<8x8xbf16>, vector<8x288xbf16>, vector<8x288xf32> -> vector<8x288xf32>
    %37 = arith.addf %31, %36 : vector<8x288xf32>
    %c6 = arith.constant 6 : index
    %c0_35 = arith.constant 0 : index
    %c0_36 = arith.constant 0 : index
    %38 = vector.load %arg1[%c6, %c0_35, %c0_36] : memref<9x8x8xbf16, #tpu.memory_space<vmem>>, vector<1x8x8xbf16>
    %39 = vector.shape_cast %38 : vector<1x8x8xbf16> to vector<8x8xbf16>
    %c0_37 = arith.constant 0 : index
    %c0_38 = arith.constant 0 : index
    %c36 = arith.constant 36 : index
    %40 = vector.load %arg0[%c0_37, %c0_38, %c36] : memref<2x8x342xbf16, #tpu.memory_space<vmem>>, vector<1x8x288xbf16>
    %41 = vector.shape_cast %40 : vector<1x8x288xbf16> to vector<8x288xbf16>
    %cst_39 = arith.constant dense<0.000000e+00> : vector<8x288xf32>
    %42 = tpu.matmul %39, %41, %cst_39 {dimension_numbers = #tpu.dot_dimension_numbers<[1], [0], [0], [1], [0, 0, 1, 1], [], []>} : vector<8x8xbf16>, vector<8x288xbf16>, vector<8x288xf32> -> vector<8x288xf32>
    %43 = arith.addf %37, %42 : vector<8x288xf32>
    %c7 = arith.constant 7 : index
    %c0_40 = arith.constant 0 : index
    %c0_41 = arith.constant 0 : index
    %44 = vector.load %arg1[%c7, %c0_40, %c0_41] : memref<9x8x8xbf16, #tpu.memory_space<vmem>>, vector<1x8x8xbf16>
    %45 = vector.shape_cast %44 : vector<1x8x8xbf16> to vector<8x8xbf16>
    %c0_42 = arith.constant 0 : index
    %c0_43 = arith.constant 0 : index
    %c37 = arith.constant 37 : index
    %46 = vector.load %arg0[%c0_42, %c0_43, %c37] : memref<2x8x342xbf16, #tpu.memory_space<vmem>>, vector<1x8x288xbf16>
    %47 = vector.shape_cast %46 : vector<1x8x288xbf16> to vector<8x288xbf16>
    %cst_44 = arith.constant dense<0.000000e+00> : vector<8x288xf32>
    %48 = tpu.matmul %45, %47, %cst_44 {dimension_numbers = #tpu.dot_dimension_numbers<[1], [0], [0], [1], [0, 0, 1, 1], [], []>} : vector<8x8xbf16>, vector<8x288xbf16>, vector<8x288xf32> -> vector<8x288xf32>
    %49 = arith.addf %43, %48 : vector<8x288xf32>
    %c8 = arith.constant 8 : index
    %c0_45 = arith.constant 0 : index
    %c0_46 = arith.constant 0 : index
    %50 = vector.load %arg1[%c8, %c0_45, %c0_46] : memref<9x8x8xbf16, #tpu.memory_space<vmem>>, vector<1x8x8xbf16>
    %51 = vector.shape_cast %50 : vector<1x8x8xbf16> to vector<8x8xbf16>
    %c0_47 = arith.constant 0 : index
    %c0_48 = arith.constant 0 : index
    %c38 = arith.constant 38 : index
    %52 = vector.load %arg0[%c0_47, %c0_48, %c38] : memref<2x8x342xbf16, #tpu.memory_space<vmem>>, vector<1x8x288xbf16>
    %53 = vector.shape_cast %52 : vector<1x8x288xbf16> to vector<8x288xbf16>
    %cst_49 = arith.constant dense<0.000000e+00> : vector<8x288xf32>
    %54 = tpu.matmul %51, %53, %cst_49 {dimension_numbers = #tpu.dot_dimension_numbers<[1], [0], [0], [1], [0, 0, 1, 1], [], []>} : vector<8x8xbf16>, vector<8x288xbf16>, vector<8x288xf32> -> vector<8x288xf32>
    %55 = arith.addf %49, %54 : vector<8x288xf32>
    %cst_50 = arith.constant 0.000000e+00 : f32
    %56 = vector.broadcast %cst_50 : f32 to vector<8x288xf32>
    %c0_51 = arith.constant 0 : index
    %c0_52 = arith.constant 0 : index
    %c0_53 = arith.constant 0 : index
    %57 = vector.load %arg1[%c0_51, %c0_52, %c0_53] : memref<9x8x8xbf16, #tpu.memory_space<vmem>>, vector<1x8x8xbf16>
    %58 = vector.shape_cast %57 : vector<1x8x8xbf16> to vector<8x8xbf16>
    %c1_54 = arith.constant 1 : index
    %c0_55 = arith.constant 0 : index
    %c0_56 = arith.constant 0 : index
    %59 = vector.load %arg0[%c1_54, %c0_55, %c0_56] : memref<2x8x342xbf16, #tpu.memory_space<vmem>>, vector<1x8x288xbf16>
    %60 = vector.shape_cast %59 : vector<1x8x288xbf16> to vector<8x288xbf16>
    %cst_57 = arith.constant dense<0.000000e+00> : vector<8x288xf32>
    %61 = tpu.matmul %58, %60, %cst_57 {dimension_numbers = #tpu.dot_dimension_numbers<[1], [0], [0], [1], [0, 0, 1, 1], [], []>} : vector<8x8xbf16>, vector<8x288xbf16>, vector<8x288xf32> -> vector<8x288xf32>
    %62 = arith.addf %56, %61 : vector<8x288xf32>
    %c1_58 = arith.constant 1 : index
    %c0_59 = arith.constant 0 : index
    %c0_60 = arith.constant 0 : index
    %63 = vector.load %arg1[%c1_58, %c0_59, %c0_60] : memref<9x8x8xbf16, #tpu.memory_space<vmem>>, vector<1x8x8xbf16>
    %64 = vector.shape_cast %63 : vector<1x8x8xbf16> to vector<8x8xbf16>
    %c1_61 = arith.constant 1 : index
    %c0_62 = arith.constant 0 : index
    %c1_63 = arith.constant 1 : index
    %65 = vector.load %arg0[%c1_61, %c0_62, %c1_63] : memref<2x8x342xbf16, #tpu.memory_space<vmem>>, vector<1x8x288xbf16>
    %66 = vector.shape_cast %65 : vector<1x8x288xbf16> to vector<8x288xbf16>
    %cst_64 = arith.constant dense<0.000000e+00> : vector<8x288xf32>
    %67 = tpu.matmul %64, %66, %cst_64 {dimension_numbers = #tpu.dot_dimension_numbers<[1], [0], [0], [1], [0, 0, 1, 1], [], []>} : vector<8x8xbf16>, vector<8x288xbf16>, vector<8x288xf32> -> vector<8x288xf32>
    %68 = arith.addf %62, %67 : vector<8x288xf32>
    %c2_65 = arith.constant 2 : index
    %c0_66 = arith.constant 0 : index
    %c0_67 = arith.constant 0 : index
    %69 = vector.load %arg1[%c2_65, %c0_66, %c0_67] : memref<9x8x8xbf16, #tpu.memory_space<vmem>>, vector<1x8x8xbf16>
    %70 = vector.shape_cast %69 : vector<1x8x8xbf16> to vector<8x8xbf16>
    %c1_68 = arith.constant 1 : index
    %c0_69 = arith.constant 0 : index
    %c2_70 = arith.constant 2 : index
    %71 = vector.load %arg0[%c1_68, %c0_69, %c2_70] : memref<2x8x342xbf16, #tpu.memory_space<vmem>>, vector<1x8x288xbf16>
    %72 = vector.shape_cast %71 : vector<1x8x288xbf16> to vector<8x288xbf16>
    %cst_71 = arith.constant dense<0.000000e+00> : vector<8x288xf32>
    %73 = tpu.matmul %70, %72, %cst_71 {dimension_numbers = #tpu.dot_dimension_numbers<[1], [0], [0], [1], [0, 0, 1, 1], [], []>} : vector<8x8xbf16>, vector<8x288xbf16>, vector<8x288xf32> -> vector<8x288xf32>
    %74 = arith.addf %68, %73 : vector<8x288xf32>
    %c3_72 = arith.constant 3 : index
    %c0_73 = arith.constant 0 : index
    %c0_74 = arith.constant 0 : index
    %75 = vector.load %arg1[%c3_72, %c0_73, %c0_74] : memref<9x8x8xbf16, #tpu.memory_space<vmem>>, vector<1x8x8xbf16>
    %76 = vector.shape_cast %75 : vector<1x8x8xbf16> to vector<8x8xbf16>
    %c1_75 = arith.constant 1 : index
    %c0_76 = arith.constant 0 : index
    %c18_77 = arith.constant 18 : index
    %77 = vector.load %arg0[%c1_75, %c0_76, %c18_77] : memref<2x8x342xbf16, #tpu.memory_space<vmem>>, vector<1x8x288xbf16>
    %78 = vector.shape_cast %77 : vector<1x8x288xbf16> to vector<8x288xbf16>
    %cst_78 = arith.constant dense<0.000000e+00> : vector<8x288xf32>
    %79 = tpu.matmul %76, %78, %cst_78 {dimension_numbers = #tpu.dot_dimension_numbers<[1], [0], [0], [1], [0, 0, 1, 1], [], []>} : vector<8x8xbf16>, vector<8x288xbf16>, vector<8x288xf32> -> vector<8x288xf32>
    %80 = arith.addf %74, %79 : vector<8x288xf32>
    %c4_79 = arith.constant 4 : index
    %c0_80 = arith.constant 0 : index
    %c0_81 = arith.constant 0 : index
    %81 = vector.load %arg1[%c4_79, %c0_80, %c0_81] : memref<9x8x8xbf16, #tpu.memory_space<vmem>>, vector<1x8x8xbf16>
    %82 = vector.shape_cast %81 : vector<1x8x8xbf16> to vector<8x8xbf16>
    %c1_82 = arith.constant 1 : index
    %c0_83 = arith.constant 0 : index
    %c19_84 = arith.constant 19 : index
    %83 = vector.load %arg0[%c1_82, %c0_83, %c19_84] : memref<2x8x342xbf16, #tpu.memory_space<vmem>>, vector<1x8x288xbf16>
    %84 = vector.shape_cast %83 : vector<1x8x288xbf16> to vector<8x288xbf16>
    %cst_85 = arith.constant dense<0.000000e+00> : vector<8x288xf32>
    %85 = tpu.matmul %82, %84, %cst_85 {dimension_numbers = #tpu.dot_dimension_numbers<[1], [0], [0], [1], [0, 0, 1, 1], [], []>} : vector<8x8xbf16>, vector<8x288xbf16>, vector<8x288xf32> -> vector<8x288xf32>
    %86 = arith.addf %80, %85 : vector<8x288xf32>
    %c5_86 = arith.constant 5 : index
    %c0_87 = arith.constant 0 : index
    %c0_88 = arith.constant 0 : index
    %87 = vector.load %arg1[%c5_86, %c0_87, %c0_88] : memref<9x8x8xbf16, #tpu.memory_space<vmem>>, vector<1x8x8xbf16>
    %88 = vector.shape_cast %87 : vector<1x8x8xbf16> to vector<8x8xbf16>
    %c1_89 = arith.constant 1 : index
    %c0_90 = arith.constant 0 : index
    %c20_91 = arith.constant 20 : index
    %89 = vector.load %arg0[%c1_89, %c0_90, %c20_91] : memref<2x8x342xbf16, #tpu.memory_space<vmem>>, vector<1x8x288xbf16>
    %90 = vector.shape_cast %89 : vector<1x8x288xbf16> to vector<8x288xbf16>
    %cst_92 = arith.constant dense<0.000000e+00> : vector<8x288xf32>
    %91 = tpu.matmul %88, %90, %cst_92 {dimension_numbers = #tpu.dot_dimension_numbers<[1], [0], [0], [1], [0, 0, 1, 1], [], []>} : vector<8x8xbf16>, vector<8x288xbf16>, vector<8x288xf32> -> vector<8x288xf32>
    %92 = arith.addf %86, %91 : vector<8x288xf32>
    %c6_93 = arith.constant 6 : index
    %c0_94 = arith.constant 0 : index
    %c0_95 = arith.constant 0 : index
    %93 = vector.load %arg1[%c6_93, %c0_94, %c0_95] : memref<9x8x8xbf16, #tpu.memory_space<vmem>>, vector<1x8x8xbf16>
    %94 = vector.shape_cast %93 : vector<1x8x8xbf16> to vector<8x8xbf16>
    %c1_96 = arith.constant 1 : index
    %c0_97 = arith.constant 0 : index
    %c36_98 = arith.constant 36 : index
    %95 = vector.load %arg0[%c1_96, %c0_97, %c36_98] : memref<2x8x342xbf16, #tpu.memory_space<vmem>>, vector<1x8x288xbf16>
    %96 = vector.shape_cast %95 : vector<1x8x288xbf16> to vector<8x288xbf16>
    %cst_99 = arith.constant dense<0.000000e+00> : vector<8x288xf32>
    %97 = tpu.matmul %94, %96, %cst_99 {dimension_numbers = #tpu.dot_dimension_numbers<[1], [0], [0], [1], [0, 0, 1, 1], [], []>} : vector<8x8xbf16>, vector<8x288xbf16>, vector<8x288xf32> -> vector<8x288xf32>
    %98 = arith.addf %92, %97 : vector<8x288xf32>
    %c7_100 = arith.constant 7 : index
    %c0_101 = arith.constant 0 : index
    %c0_102 = arith.constant 0 : index
    %99 = vector.load %arg1[%c7_100, %c0_101, %c0_102] : memref<9x8x8xbf16, #tpu.memory_space<vmem>>, vector<1x8x8xbf16>
    %100 = vector.shape_cast %99 : vector<1x8x8xbf16> to vector<8x8xbf16>
    %c1_103 = arith.constant 1 : index
    %c0_104 = arith.constant 0 : index
    %c37_105 = arith.constant 37 : index
    %101 = vector.load %arg0[%c1_103, %c0_104, %c37_105] : memref<2x8x342xbf16, #tpu.memory_space<vmem>>, vector<1x8x288xbf16>
    %102 = vector.shape_cast %101 : vector<1x8x288xbf16> to vector<8x288xbf16>
    %cst_106 = arith.constant dense<0.000000e+00> : vector<8x288xf32>
    %103 = tpu.matmul %100, %102, %cst_106 {dimension_numbers = #tpu.dot_dimension_numbers<[1], [0], [0], [1], [0, 0, 1, 1], [], []>} : vector<8x8xbf16>, vector<8x288xbf16>, vector<8x288xf32> -> vector<8x288xf32>
    %104 = arith.addf %98, %103 : vector<8x288xf32>
    %c8_107 = arith.constant 8 : index
    %c0_108 = arith.constant 0 : index
    %c0_109 = arith.constant 0 : index
    %105 = vector.load %arg1[%c8_107, %c0_108, %c0_109] : memref<9x8x8xbf16, #tpu.memory_space<vmem>>, vector<1x8x8xbf16>
    %106 = vector.shape_cast %105 : vector<1x8x8xbf16> to vector<8x8xbf16>
    %c1_110 = arith.constant 1 : index
    %c0_111 = arith.constant 0 : index
    %c38_112 = arith.constant 38 : index
    %107 = vector.load %arg0[%c1_110, %c0_111, %c38_112] : memref<2x8x342xbf16, #tpu.memory_space<vmem>>, vector<1x8x288xbf16>
    %108 = vector.shape_cast %107 : vector<1x8x288xbf16> to vector<8x288xbf16>
    %cst_113 = arith.constant dense<0.000000e+00> : vector<8x288xf32>
    %109 = tpu.matmul %106, %108, %cst_113 {dimension_numbers = #tpu.dot_dimension_numbers<[1], [0], [0], [1], [0, 0, 1, 1], [], []>} : vector<8x8xbf16>, vector<8x288xbf16>, vector<8x288xf32> -> vector<8x288xf32>
    %110 = arith.addf %104, %109 : vector<8x288xf32>
    %cst_114 = arith.constant 0.000000e+00 : f32
    %111 = vector.broadcast %cst_114 : f32 to vector<8x1xf32>
    %112 = vector.broadcast %0 : vector<1x288xf32> to vector<8x288xf32>
    %113 = arith.mulf %55, %112 : vector<8x288xf32>
    %cst_115 = arith.constant dense<0.000000e+00> : vector<8xf32>
    %114 = vector.multi_reduction <add>, %113, %cst_115 [1] : vector<8x288xf32> to vector<8xf32>
    %115 = vector.shape_cast %114 : vector<8xf32> to vector<8x1xf32>
    %116 = arith.addf %111, %115 : vector<8x1xf32>
    %117 = vector.broadcast %0 : vector<1x288xf32> to vector<8x288xf32>
    %118 = arith.mulf %110, %117 : vector<8x288xf32>
    %cst_116 = arith.constant dense<0.000000e+00> : vector<8xf32>
    %119 = vector.multi_reduction <add>, %118, %cst_116 [1] : vector<8x288xf32> to vector<8xf32>
    %120 = vector.shape_cast %119 : vector<8xf32> to vector<8x1xf32>
    %121 = arith.addf %116, %120 : vector<8x1xf32>
    %cst_117 = arith.constant 0.001953125 : f32
    %122 = vector.broadcast %cst_117 : f32 to vector<8x1xf32>
    %123 = arith.mulf %121, %122 : vector<8x1xf32>
    %cst_118 = arith.constant 0.000000e+00 : f32
    %124 = vector.broadcast %cst_118 : f32 to vector<8x1xf32>
    %125 = vector.broadcast %123 : vector<8x1xf32> to vector<8x288xf32>
    %126 = arith.subf %55, %125 : vector<8x288xf32>
    %127 = vector.broadcast %0 : vector<1x288xf32> to vector<8x288xf32>
    %128 = arith.mulf %126, %127 : vector<8x288xf32>
    %129 = arith.mulf %128, %128 : vector<8x288xf32>
    %cst_119 = arith.constant dense<0.000000e+00> : vector<8xf32>
    %130 = vector.multi_reduction <add>, %129, %cst_119 [1] : vector<8x288xf32> to vector<8xf32>
    %131 = vector.shape_cast %130 : vector<8xf32> to vector<8x1xf32>
    %132 = arith.addf %124, %131 : vector<8x1xf32>
    %133 = vector.broadcast %123 : vector<8x1xf32> to vector<8x288xf32>
    %134 = arith.subf %110, %133 : vector<8x288xf32>
    %135 = vector.broadcast %0 : vector<1x288xf32> to vector<8x288xf32>
    %136 = arith.mulf %134, %135 : vector<8x288xf32>
    %137 = arith.mulf %136, %136 : vector<8x288xf32>
    %cst_120 = arith.constant dense<0.000000e+00> : vector<8xf32>
    %138 = vector.multi_reduction <add>, %137, %cst_120 [1] : vector<8x288xf32> to vector<8xf32>
    %139 = vector.shape_cast %138 : vector<8xf32> to vector<8x1xf32>
    %140 = arith.addf %132, %139 : vector<8x1xf32>
    %cst_121 = arith.constant 0.001953125 : f32
    %141 = vector.broadcast %cst_121 : f32 to vector<8x1xf32>
    %142 = arith.mulf %140, %141 : vector<8x1xf32>
    %cst_122 = arith.constant 9.99999974E-6 : f32
    %143 = vector.broadcast %cst_122 : f32 to vector<8x1xf32>
    %144 = arith.addf %142, %143 : vector<8x1xf32>
    %145 = math.rsqrt %144 : vector<8x1xf32>
    %c0_123 = arith.constant 0 : index
    %c0_124 = arith.constant 0 : index
    %146 = vector.load %arg2[%c0_123, %c0_124] : memref<8x1xf32, #tpu.memory_space<vmem>>, vector<8x1xf32>
    %147 = arith.mulf %146, %145 : vector<8x1xf32>
    %c0_125 = arith.constant 0 : index
    %c0_126 = arith.constant 0 : index
    %148 = vector.load %arg3[%c0_125, %c0_126] : memref<8x1xf32, #tpu.memory_space<vmem>>, vector<8x1xf32>
    %149 = arith.mulf %123, %147 : vector<8x1xf32>
    %150 = arith.subf %148, %149 : vector<8x1xf32>
    %151 = vector.broadcast %147 : vector<8x1xf32> to vector<8x288xf32>
    %152 = arith.mulf %55, %151 : vector<8x288xf32>
    %153 = vector.broadcast %150 : vector<8x1xf32> to vector<8x288xf32>
    %154 = arith.addf %152, %153 : vector<8x288xf32>
    %cst_127 = arith.constant 0.000000e+00 : f32
    %155 = vector.broadcast %cst_127 : f32 to vector<8x288xf32>
    %156 = arith.maximumf %154, %155 : vector<8x288xf32>
    %c0_128 = arith.constant 0 : index
    %c0_129 = arith.constant 0 : index
    %c0_130 = arith.constant 0 : index
    %157 = vector.load %arg5[%c0_128, %c0_129, %c0_130] : memref<2x8x288xf32, #tpu.memory_space<vmem>>, vector<1x8x288xf32>
    %158 = vector.shape_cast %157 : vector<1x8x288xf32> to vector<8x288xf32>
    %159 = vector.shape_cast %156 : vector<8x288xf32> to vector<1x8x288xf32>
    tpu.vector_store %arg5[%c0_128, %c0_129, %c0_130], %159 {strides = array<i32>} : memref<2x8x288xf32, #tpu.memory_space<vmem>>, vector<1x8x288xf32>,
    %160 = vector.broadcast %147 : vector<8x1xf32> to vector<8x288xf32>
    %161 = arith.mulf %110, %160 : vector<8x288xf32>
    %162 = vector.broadcast %150 : vector<8x1xf32> to vector<8x288xf32>
    %163 = arith.addf %161, %162 : vector<8x288xf32>
    %cst_131 = arith.constant 0.000000e+00 : f32
    %164 = vector.broadcast %cst_131 : f32 to vector<8x288xf32>
    %165 = arith.maximumf %163, %164 : vector<8x288xf32>
    %c1_132 = arith.constant 1 : index
    %c0_133 = arith.constant 0 : index
    %c0_134 = arith.constant 0 : index
    %166 = vector.load %arg5[%c1_132, %c0_133, %c0_134] : memref<2x8x288xf32, #tpu.memory_space<vmem>>, vector<1x8x288xf32>
    %167 = vector.shape_cast %166 : vector<1x8x288xf32> to vector<8x288xf32>
    %168 = vector.shape_cast %165 : vector<8x288xf32> to vector<1x8x288xf32>
    tpu.vector_store %arg5[%c1_132, %c0_133, %c0_134], %168 {strides = array<i32>} : memref<2x8x288xf32, #tpu.memory_space<vmem>>, vector<1x8x288xf32>,
    return
  }
}

</mosaic_0001>

<llo_original>
// kernel: my_cnn_encoder_forward.1
$region0: #{my_cnn_encoder_forward.1}
  #allocation0 [shape = 'u32[]', space=smem, size = 0x4, offset = 0x4, fixed_abs, tag = 'smem constant byte address 0x4 - core index']
  #allocation1 [shape = 'u32[144,128]{1,0:T(1,128)}', space=vmem, size = 0x12000, scoped, tag = 'internal scratch']
  %s0 = inlined_call_operand.vmem [shape: bf16[2,8,342], index: 0, kind: input, shape index: {}]
  %s1 = inlined_call_operand.vmem [shape: bf16[9,8,8], index: 1, kind: input, shape index: {}]
  %s2 = inlined_call_operand.vmem [shape: f32[8,1], index: 2, kind: input, shape index: {}]
  %s3 = inlined_call_operand.vmem [shape: f32[8,1], index: 3, kind: input, shape index: {}]
  %s4 = inlined_call_operand.vmem [shape: f32[1,288], index: 4, kind: input, shape index: {}]
  %s5 = inlined_call_operand.vmem [shape: f32[2,8,288], index: 5, kind: output, shape index: {}]
  %s6 = sld [smem:[#allocation0]]
  $region30: #{my_cnn_encoder_forward.1} parent=0
    _
  %s8 = ssub.s32 1, %s6
  %s9 = scalar_select 0, %s8, %s6
  // Predicated region
  $region2: #{my_cnn_encoder_forward.1} parent=0 // pred_check
    _
  $region3: #{my_cnn_encoder_forward.1} parent=0 // pred_check_branch
    %11 = sbr.rel (0) target = $region5
  $region4: #{my_cnn_encoder_forward.1} parent=0 // pred_region
    _
  $region5: #{my_cnn_encoder_forward.1} parent=0 // pred_fallthru
    _
  // Predicated region
  $region6: #{my_cnn_encoder_forward.1} parent=0 // pred_check
    _
  $region7: #{my_cnn_encoder_forward.1} parent=0 // pred_check_branch
    %13 = sbr.rel (0) target = $region9
  $region8: #{my_cnn_encoder_forward.1} parent=0 // pred_region
    _
  $region9: #{my_cnn_encoder_forward.1} parent=0 // pred_fallthru
    _
  // Predicated region
  $region10: #{my_cnn_encoder_forward.1} parent=0 // pred_check
    _
  $region11: #{my_cnn_encoder_forward.1} parent=0 // pred_check_branch
    %15 = sbr.rel (0) target = $region13
  $region12: #{my_cnn_encoder_forward.1} parent=0 // pred_region
    _
  $region13: #{my_cnn_encoder_forward.1} parent=0 // pred_fallthru
    _
  // Predicated region
  $region14: #{my_cnn_encoder_forward.1} parent=0 // pred_check
    _
  $region15: #{my_cnn_encoder_forward.1} parent=0 // pred_check_branch
    %17 = sbr.rel (0) target = $region17
  $region16: #{my_cnn_encoder_forward.1} parent=0 // pred_region
    _
  $region17: #{my_cnn_encoder_forward.1} parent=0 // pred_fallthru
    _
  // Predicated region
  $region18: #{my_cnn_encoder_forward.1} parent=0 // pred_check
    _
  $region19: #{my_cnn_encoder_forward.1} parent=0 // pred_check_branch
    %19 = sbr.rel (0) target = $region21
  $region20: #{my_cnn_encoder_forward.1} parent=0 // pred_region
    _
  $region21: #{my_cnn_encoder_forward.1} parent=0 // pred_fallthru
    _
  %v21 = vld [vmem:[%s4] sm:$0x7]
  %v22 = vld [vmem:[%s1] sm:$0xf]
  %v23 = vld [vmem:[%s0] sm:$0xff]
  %v24 = vld [vmem:[%s0 + $0x8] sm:$0xf]
  %s25 = scalar_lea.vmem %s1, 4
  %v26 = vld [vmem:[%s25] sm:$0xf]
  %v29 = vunpack.c.l.b16 %v23
  %v30 = vunpack.c.h.b16 %v23
  %v31 = vunpack.c.l.b16 %v24
  %v32 = vpack.c.b16 %v29, %v29
  %v33 = vpack.c.b16 %v30, %v30
  %v34 = vpack.c.b16 %v31, %v31
  %35 = vrot.lane.b32.xlu0 %v32, 127
  %v36 = vpop.permute.xlu0 %35
  %37 = vrot.lane.b32.xlu0 %v33, 127
  %v38 = vpop.permute.xlu0 %37
  %39 = vrot.lane.b32.xlu0 %v34, 127
  %v40 = vpop.permute.xlu0 %39
  %vm41 = vcmask 1039360
  %v42 = vsel %vm41, %v36, %v38
  %v43 = vsel %vm41, %v38, %v40
  %vm44 = vcmask 64512
  %v46 = vsel %vm44, %v26, 0
  %vm48 = vcmask 1043456
  %v50 = vsel %vm48, %v42, 0
  %v53 = vsel %vm48, %v43, 0
  %v56 = vsel %vm48, %v40, 0
  %58 = vmatprep.subr.bf16.mxu0 %v53
  %59 = vmatpush1.bf16.msra.mxu0 %v50
  %60 = vmatprep.subr.bf16.mxu0 0
  %61 = vmatpush1.bf16.msra.mxu0 0
  %62 = vmatprep.subr.bf16.mxu0 0
  %63 = vmatpush1.bf16.msra.mxu0 0
  %64 = vmatprep.subr.bf16.mxu0 0
  %65 = vmatpush1.bf16.msra.mxu0 0
  %66 = vmatprep.subr.bf16.mxu0 0
  %67 = vmatpush1.bf16.msra.mxu0 0
  %68 = vmatprep.subr.bf16.mxu0 0
  %69 = vmatpush1.bf16.msra.mxu0 0
  %70 = vmatprep.subr.bf16.mxu0 0
  %71 = vmatpush1.bf16.msra.mxu0 0
  %72 = vmatprep.subr.bf16.mxu0 0
  %73 = vmatpush1.bf16.msra.mxu0 0
  %74 = vmatprep.subr.bf16.mxu0 0
  %75 = vmatpush1.bf16.msra.mxu0 0
  %76 = vmatprep.subr.bf16.mxu0 0
  %77 = vmatpush1.bf16.msra.mxu0 0
  %78 = vmatprep.subr.bf16.mxu0 0
  %79 = vmatpush1.bf16.msra.mxu0 0
  %80 = vmatprep.subr.bf16.mxu0 0
  %81 = vmatpush1.bf16.msra.mxu0 0
  %82 = vmatprep.subr.bf16.mxu0 0
  %83 = vmatpush1.bf16.msra.mxu0 0
  %84 = vmatprep.subr.bf16.mxu0 0
  %85 = vmatpush1.bf16.msra.mxu0 0
  %86 = vmatprep.subr.bf16.mxu0 0
  %87 = vmatpush1.bf16.msra.mxu0 0
  %88 = vmatprep.subr.bf16.mxu0 0
  %89 = vmatpush1.bf16.msra.mxu0 0
  %90 = vmatprep.mubr.bf16.mxu0 0
  %91 = vmatmul.mubr.bf16.gmra.mrb[0].mxu0 %v46
  %v92 = vpop.f32.mrb[0].mxu0
  %v93 = vadd.f32 0.0, %v92
  %v94 = vpop.f32.mrb[0].mxu0
  %v95 = vadd.f32 0.0, %v94
  %v96 = vpop.f32.mrb[0].mxu0
  %v97 = vpop.f32.mrb[0].mxu0
  %98 = vdwg.mxu0
  %99 = vmatprep.subr.bf16.mxu0 0
  %100 = vmatpush1.bf16.msra.mxu0 %v56
  %101 = vmatprep.subr.bf16.mxu0 0
  %102 = vmatpush1.bf16.msra.mxu0 0
  %103 = vmatprep.subr.bf16.mxu0 0
  %104 = vmatpush1.bf16.msra.mxu0 0
  %105 = vmatprep.subr.bf16.mxu0 0
  %106 = vmatpush1.bf16.msra.mxu0 0
  %107 = vmatprep.subr.bf16.mxu0 0
  %108 = vmatpush1.bf16.msra.mxu0 0
  %109 = vmatprep.subr.bf16.mxu0 0
  %110 = vmatpush1.bf16.msra.mxu0 0
  %111 = vmatprep.subr.bf16.mxu0 0
  %112 = vmatpush1.bf16.msra.mxu0 0
  %113 = vmatprep.subr.bf16.mxu0 0
  %114 = vmatpush1.bf16.msra.mxu0 0
  %115 = vmatprep.subr.bf16.mxu0 0
  %116 = vmatpush1.bf16.msra.mxu0 0
  %117 = vmatprep.subr.bf16.mxu0 0
  %118 = vmatpush1.bf16.msra.mxu0 0
  %119 = vmatprep.subr.bf16.mxu0 0
  %120 = vmatpush1.bf16.msra.mxu0 0
  %121 = vmatprep.subr.bf16.mxu0 0
  %122 = vmatpush1.bf16.msra.mxu0 0
  %123 = vmatprep.subr.bf16.mxu0 0
  %124 = vmatpush1.bf16.msra.mxu0 0
  %125 = vmatprep.subr.bf16.mxu0 0
  %126 = vmatpush1.bf16.msra.mxu0 0
  %127 = vmatprep.subr.bf16.mxu0 0
  %128 = vmatpush1.bf16.msra.mxu0 0
  %129 = vmatprep.subr.bf16.mxu0 0
  %130 = vmatpush1.bf16.msra.mxu0 0
  %131 = vmatprep.mubr.bf16.mxu0 0
  %132 = vmatmul.mubr.bf16.gmra.mrb[0].mxu0 %v46
  %v133 = vpop.f32.mrb[0].mxu0
  %v134 = vadd.f32 0.0, %v133
  %v135 = vpop.f32.mrb[0].mxu0
  %v136 = vpop.f32.mrb[0].mxu0
  %v137 = vpop.f32.mrb[0].mxu0
  %138 = vdwg.mxu0
  %v140 = vsel %vm44, %v22, 0
  %v143 = vsel %vm48, %v32, 0
  %v146 = vsel %vm48, %v33, 0
  %v149 = vsel %vm48, %v34, 0
  %151 = vmatprep.subr.bf16.mxu0 %v146
  %152 = vmatpush1.bf16.msra.mxu0 %v143
  %153 = vmatprep.subr.bf16.mxu0 0
  %154 = vmatpush1.bf16.msra.mxu0 0
  %155 = vmatprep.subr.bf16.mxu0 0
  %156 = vmatpush1.bf16.msra.mxu0 0
  %157 = vmatprep.subr.bf16.mxu0 0
  %158 = vmatpush1.bf16.msra.mxu0 0
  %159 = vmatprep.subr.bf16.mxu0 0
  %160 = vmatpush1.bf16.msra.mxu0 0
  %161 = vmatprep.subr.bf16.mxu0 0
  %162 = vmatpush1.bf16.msra.mxu0 0
  %163 = vmatprep.subr.bf16.mxu0 0
  %164 = vmatpush1.bf16.msra.mxu0 0
  %165 = vmatprep.subr.bf16.mxu0 0
  %166 = vmatpush1.bf16.msra.mxu0 0
  %167 = vmatprep.subr.bf16.mxu0 0
  %168 = vmatpush1.bf16.msra.mxu0 0
  %169 = vmatprep.subr.bf16.mxu0 0
  %170 = vmatpush1.bf16.msra.mxu0 0
  %171 = vmatprep.subr.bf16.mxu0 0
  %172 = vmatpush1.bf16.msra.mxu0 0
  %173 = vmatprep.subr.bf16.mxu0 0
  %174 = vmatpush1.bf16.msra.mxu0 0
  %175 = vmatprep.subr.bf16.mxu0 0
  %176 = vmatpush1.bf16.msra.mxu0 0
  %177 = vmatprep.subr.bf16.mxu0 0
  %178 = vmatpush1.bf16.msra.mxu0 0
  %179 = vmatprep.subr.bf16.mxu0 0
  %180 = vmatpush1.bf16.msra.mxu0 0
  %181 = vmatprep.subr.bf16.mxu0 0
  %182 = vmatpush1.bf16.msra.mxu0 0
  %183 = vmatprep.mubr.bf16.mxu0 0
  %184 = vmatmul.mubr.bf16.gmra.mrb[0].mxu0 %v140
  %v185 = vpop.f32.mrb[0].mxu0
  %v186 = vadd.f32 %v93, %v185
  %v187 = vpop.f32.mrb[0].mxu0
  %v188 = vadd.f32 %v95, %v187
  %v189 = vpop.f32.mrb[0].mxu0
  %v190 = vpop.f32.mrb[0].mxu0
  %191 = vdwg.mxu0
  %192 = vmatprep.subr.bf16.mxu0 0
  %193 = vmatpush1.bf16.msra.mxu0 %v149
  %194 = vmatprep.subr.bf16.mxu0 0
  %195 = vmatpush1.bf16.msra.mxu0 0
  %196 = vmatprep.subr.bf16.mxu0 0
  %197 = vmatpush1.bf16.msra.mxu0 0
  %198 = vmatprep.subr.bf16.mxu0 0
  %199 = vmatpush1.bf16.msra.mxu0 0
  %200 = vmatprep.subr.bf16.mxu0 0
  %201 = vmatpush1.bf16.msra.mxu0 0
  %202 = vmatprep.subr.bf16.mxu0 0
  %203 = vmatpush1.bf16.msra.mxu0 0
  %204 = vmatprep.subr.bf16.mxu0 0
  %205 = vmatpush1.bf16.msra.mxu0 0
  %206 = vmatprep.subr.bf16.mxu0 0
  %207 = vmatpush1.bf16.msra.mxu0 0
  %208 = vmatprep.subr.bf16.mxu0 0
  %209 = vmatpush1.bf16.msra.mxu0 0
  %210 = vmatprep.subr.bf16.mxu0 0
  %211 = vmatpush1.bf16.msra.mxu0 0
  %212 = vmatprep.subr.bf16.mxu0 0
  %213 = vmatpush1.bf16.msra.mxu0 0
  %214 = vmatprep.subr.bf16.mxu0 0
  %215 = vmatpush1.bf16.msra.mxu0 0
  %216 = vmatprep.subr.bf16.mxu0 0
  %217 = vmatpush1.bf16.msra.mxu0 0
  %218 = vmatprep.subr.bf16.mxu0 0
  %219 = vmatpush1.bf16.msra.mxu0 0
  %220 = vmatprep.subr.bf16.mxu0 0
  %221 = vmatpush1.bf16.msra.mxu0 0
  %222 = vmatprep.subr.bf16.mxu0 0
  %223 = vmatpush1.bf16.msra.mxu0 0
  %224 = vmatprep.mubr.bf16.mxu0 0
  %225 = vmatmul.mubr.bf16.gmra.mrb[0].mxu0 %v140
  %v226 = vpop.f32.mrb[0].mxu0
  %v227 = vadd.f32 %v134, %v226
  %v228 = vpop.f32.mrb[0].mxu0
  %v229 = vpop.f32.mrb[0].mxu0
  %v230 = vpop.f32.mrb[0].mxu0
  %231 = vdwg.mxu0
  %s232 = scalar_lea.vmem %s1, 8
  %v233 = vld [vmem:[%s232] sm:$0xf]
  %234 = vrot.lane.b32.xlu0 %v32, 126
  %v235 = vpop.permute.xlu0 %234
  %236 = vrot.lane.b32.xlu0 %v33, 126
  %v237 = vpop.permute.xlu0 %236
  %238 = vrot.lane.b32.xlu0 %v34, 126
  %v239 = vpop.permute.xlu0 %238
  %vm240 = vcmask 1031168
  %v241 = vsel %vm240, %v235, %v237
  %v242 = vsel %vm240, %v237, %v239
  %v244 = vsel %vm44, %v233, 0
  %v247 = vsel %vm48, %v241, 0
  %v250 = vsel %vm48, %v242, 0
  %v253 = vsel %vm48, %v239, 0
  %255 = vmatprep.subr.bf16.mxu0 %v250
  %256 = vmatpush1.bf16.msra.mxu0 %v247
  %257 = vmatprep.subr.bf16.mxu0 0
  %258 = vmatpush1.bf16.msra.mxu0 0
  %259 = vmatprep.subr.bf16.mxu0 0
  %260 = vmatpush1.bf16.msra.mxu0 0
  %261 = vmatprep.subr.bf16.mxu0 0
  %262 = vmatpush1.bf16.msra.mxu0 0
  %263 = vmatprep.subr.bf16.mxu0 0
  %264 = vmatpush1.bf16.msra.mxu0 0
  %265 = vmatprep.subr.bf16.mxu0 0
  %266 = vmatpush1.bf16.msra.mxu0 0
  %267 = vmatprep.subr.bf16.mxu0 0
  %268 = vmatpush1.bf16.msra.mxu0 0
  %269 = vmatprep.subr.bf16.mxu0 0
  %270 = vmatpush1.bf16.msra.mxu0 0
  %271 = vmatprep.subr.bf16.mxu0 0
  %272 = vmatpush1.bf16.msra.mxu0 0
  %273 = vmatprep.subr.bf16.mxu0 0
  %274 = vmatpush1.bf16.msra.mxu0 0
  %275 = vmatprep.subr.bf16.mxu0 0
  %276 = vmatpush1.bf16.msra.mxu0 0
  %277 = vmatprep.subr.bf16.mxu0 0
  %278 = vmatpush1.bf16.msra.mxu0 0
  %279 = vmatprep.subr.bf16.mxu0 0
  %280 = vmatpush1.bf16.msra.mxu0 0
  %281 = vmatprep.subr.bf16.mxu0 0
  %282 = vmatpush1.bf16.msra.mxu0 0
  %283 = vmatprep.subr.bf16.mxu0 0
  %284 = vmatpush1.bf16.msra.mxu0 0
  %285 = vmatprep.subr.bf16.mxu0 0
  %286 = vmatpush1.bf16.msra.mxu0 0
  %287 = vmatprep.mubr.bf16.mxu0 0
  %288 = vmatmul.mubr.bf16.gmra.mrb[0].mxu0 %v244
  %v289 = vpop.f32.mrb[0].mxu0
  %v290 = vadd.f32 0.0, %v289
  %v291 = vpop.f32.mrb[0].mxu0
  %v292 = vadd.f32 0.0, %v291
  %v293 = vpop.f32.mrb[0].mxu0
  %v294 = vpop.f32.mrb[0].mxu0
  %295 = vdwg.mxu0
  %296 = vmatprep.subr.bf16.mxu0 0
  %297 = vmatpush1.bf16.msra.mxu0 %v253
  %298 = vmatprep.subr.bf16.mxu0 0
  %299 = vmatpush1.bf16.msra.mxu0 0
  %300 = vmatprep.subr.bf16.mxu0 0
  %301 = vmatpush1.bf16.msra.mxu0 0
  %302 = vmatprep.subr.bf16.mxu0 0
  %303 = vmatpush1.bf16.msra.mxu0 0
  %304 = vmatprep.subr.bf16.mxu0 0
  %305 = vmatpush1.bf16.msra.mxu0 0
  %306 = vmatprep.subr.bf16.mxu0 0
  %307 = vmatpush1.bf16.msra.mxu0 0
  %308 = vmatprep.subr.bf16.mxu0 0
  %309 = vmatpush1.bf16.msra.mxu0 0
  %310 = vmatprep.subr.bf16.mxu0 0
  %311 = vmatpush1.bf16.msra.mxu0 0
  %312 = vmatprep.subr.bf16.mxu0 0
  %313 = vmatpush1.bf16.msra.mxu0 0
  %314 = vmatprep.subr.bf16.mxu0 0
  %315 = vmatpush1.bf16.msra.mxu0 0
  %316 = vmatprep.subr.bf16.mxu0 0
  %317 = vmatpush1.bf16.msra.mxu0 0
  %318 = vmatprep.subr.bf16.mxu0 0
  %319 = vmatpush1.bf16.msra.mxu0 0
  %320 = vmatprep.subr.bf16.mxu0 0
  %321 = vmatpush1.bf16.msra.mxu0 0
  %322 = vmatprep.subr.bf16.mxu0 0
  %323 = vmatpush1.bf16.msra.mxu0 0
  %324 = vmatprep.subr.bf16.mxu0 0
  %325 = vmatpush1.bf16.msra.mxu0 0
  %326 = vmatprep.subr.bf16.mxu0 0
  %327 = vmatpush1.bf16.msra.mxu0 0
  %328 = vmatprep.mubr.bf16.mxu0 0
  %329 = vmatmul.mubr.bf16.gmra.mrb[0].mxu0 %v244
  %v330 = vpop.f32.mrb[0].mxu0
  %v331 = vadd.f32 0.0, %v330
  %v332 = vpop.f32.mrb[0].mxu0
  %v333 = vpop.f32.mrb[0].mxu0
  %v334 = vpop.f32.mrb[0].mxu0
  %335 = vdwg.mxu0
  %v336 = vadd.f32 %v186, %v290
  %v337 = vadd.f32 %v188, %v292
  %v338 = vadd.f32 %v227, %v331
  %s339 = scalar_lea.vmem %s1, 12
  %v340 = vld [vmem:[%s339] sm:$0xf]
  %341 = vrot.lane.b32.xlu0 %v32, 110
  %v342 = vpop.permute.xlu0 %341
  %343 = vrot.lane.b32.xlu0 %v33, 110
  %v344 = vpop.permute.xlu0 %343
  %345 = vrot.lane.b32.xlu0 %v34, 110
  %v346 = vpop.permute.xlu0 %345
  %vm347 = vcmask 900096
  %v348 = vsel %vm347, %v342, %v344
  %v349 = vsel %vm347, %v344, %v346
  %v351 = vsel %vm44, %v340, 0
  %v354 = vsel %vm48, %v348, 0
  %v357 = vsel %vm48, %v349, 0
  %v360 = vsel %vm48, %v346, 0
  %362 = vmatprep.subr.bf16.mxu0 %v357
  %363 = vmatpush1.bf16.msra.mxu0 %v354
  %364 = vmatprep.subr.bf16.mxu0 0
  %365 = vmatpush1.bf16.msra.mxu0 0
  %366 = vmatprep.subr.bf16.mxu0 0
  %367 = vmatpush1.bf16.msra.mxu0 0
  %368 = vmatprep.subr.bf16.mxu0 0
  %369 = vmatpush1.bf16.msra.mxu0 0
  %370 = vmatprep.subr.bf16.mxu0 0
  %371 = vmatpush1.bf16.msra.mxu0 0
  %372 = vmatprep.subr.bf16.mxu0 0
  %373 = vmatpush1.bf16.msra.mxu0 0
  %374 = vmatprep.subr.bf16.mxu0 0
  %375 = vmatpush1.bf16.msra.mxu0 0
  %376 = vmatprep.subr.bf16.mxu0 0
  %377 = vmatpush1.bf16.msra.mxu0 0
  %378 = vmatprep.subr.bf16.mxu0 0
  %379 = vmatpush1.bf16.msra.mxu0 0
  %380 = vmatprep.subr.bf16.mxu0 0
  %381 = vmatpush1.bf16.msra.mxu0 0
  %382 = vmatprep.subr.bf16.mxu0 0
  %383 = vmatpush1.bf16.msra.mxu0 0
  %384 = vmatprep.subr.bf16.mxu0 0
  %385 = vmatpush1.bf16.msra.mxu0 0
  %386 = vmatprep.subr.bf16.mxu0 0
  %387 = vmatpush1.bf16.msra.mxu0 0
  %388 = vmatprep.subr.bf16.mxu0 0
  %389 = vmatpush1.bf16.msra.mxu0 0
  %390 = vmatprep.subr.bf16.mxu0 0
  %391 = vmatpush1.bf16.msra.mxu0 0
  %392 = vmatprep.subr.bf16.mxu0 0
  %393 = vmatpush1.bf16.msra.mxu0 0
  %394 = vmatprep.mubr.bf16.mxu0 0
  %395 = vmatmul.mubr.bf16.gmra.mrb[0].mxu0 %v351
  %v396 = vpop.f32.mrb[0].mxu0
  %v397 = vadd.f32 0.0, %v396
  %v398 = vpop.f32.mrb[0].mxu0
  %v399 = vadd.f32 0.0, %v398
  %v400 = vpop.f32.mrb[0].mxu0
  %v401 = vpop.f32.mrb[0].mxu0
  %402 = vdwg.mxu0
  %403 = vmatprep.subr.bf16.mxu0 0
  %404 = vmatpush1.bf16.msra.mxu0 %v360
  %405 = vmatprep.subr.bf16.mxu0 0
  %406 = vmatpush1.bf16.msra.mxu0 0
  %407 = vmatprep.subr.bf16.mxu0 0
  %408 = vmatpush1.bf16.msra.mxu0 0
  %409 = vmatprep.subr.bf16.mxu0 0
  %410 = vmatpush1.bf16.msra.mxu0 0
  %411 = vmatprep.subr.bf16.mxu0 0
  %412 = vmatpush1.bf16.msra.mxu0 0
  %413 = vmatprep.subr.bf16.mxu0 0
  %414 = vmatpush1.bf16.msra.mxu0 0
  %415 = vmatprep.subr.bf16.mxu0 0
  %416 = vmatpush1.bf16.msra.mxu0 0
  %417 = vmatprep.subr.bf16.mxu0 0
  %418 = vmatpush1.bf16.msra.mxu0 0
  %419 = vmatprep.subr.bf16.mxu0 0
  %420 = vmatpush1.bf16.msra.mxu0 0
  %421 = vmatprep.subr.bf16.mxu0 0
  %422 = vmatpush1.bf16.msra.mxu0 0
  %423 = vmatprep.subr.bf16.mxu0 0
  %424 = vmatpush1.bf16.msra.mxu0 0
  %425 = vmatprep.subr.bf16.mxu0 0
  %426 = vmatpush1.bf16.msra.mxu0 0
  %427 = vmatprep.subr.bf16.mxu0 0
  %428 = vmatpush1.bf16.msra.mxu0 0
  %429 = vmatprep.subr.bf16.mxu0 0
  %430 = vmatpush1.bf16.msra.mxu0 0
  %431 = vmatprep.subr.bf16.mxu0 0
  %432 = vmatpush1.bf16.msra.mxu0 0
  %433 = vmatprep.subr.bf16.mxu0 0
  %434 = vmatpush1.bf16.msra.mxu0 0
  %435 = vmatprep.mubr.bf16.mxu0 0
  %436 = vmatmul.mubr.bf16.gmra.mrb[0].mxu0 %v351
  %v437 = vpop.f32.mrb[0].mxu0
  %v438 = vadd.f32 0.0, %v437
  %v439 = vpop.f32.mrb[0].mxu0
  %v440 = vpop.f32.mrb[0].mxu0
  %v441 = vpop.f32.mrb[0].mxu0
  %442 = vdwg.mxu0
  %v443 = vadd.f32 %v336, %v397
  %v444 = vadd.f32 %v337, %v399
  %v445 = vadd.f32 %v338, %v438
  %s446 = scalar_lea.vmem %s1, 16
  %v447 = vld [vmem:[%s446] sm:$0xf]
  %448 = vrot.lane.b32.xlu0 %v32, 109
  %v449 = vpop.permute.xlu0 %448
  %450 = vrot.lane.b32.xlu0 %v33, 109
  %v451 = vpop.permute.xlu0 %450
  %452 = vrot.lane.b32.xlu0 %v34, 109
  %v453 = vpop.permute.xlu0 %452
  %vm454 = vcmask 891904
  %v455 = vsel %vm454, %v449, %v451
  %v456 = vsel %vm454, %v451, %v453
  %v458 = vsel %vm44, %v447, 0
  %v461 = vsel %vm48, %v455, 0
  %v464 = vsel %vm48, %v456, 0
  %v467 = vsel %vm48, %v453, 0
  %469 = vmatprep.subr.bf16.mxu0 %v464
  %470 = vmatpush1.bf16.msra.mxu0 %v461
  %471 = vmatprep.subr.bf16.mxu0 0
  %472 = vmatpush1.bf16.msra.mxu0 0
  %473 = vmatprep.subr.bf16.mxu0 0
  %474 = vmatpush1.bf16.msra.mxu0 0
  %475 = vmatprep.subr.bf16.mxu0 0
  %476 = vmatpush1.bf16.msra.mxu0 0
  %477 = vmatprep.subr.bf16.mxu0 0
  %478 = vmatpush1.bf16.msra.mxu0 0
  %479 = vmatprep.subr.bf16.mxu0 0
  %480 = vmatpush1.bf16.msra.mxu0 0
  %481 = vmatprep.subr.bf16.mxu0 0
  %482 = vmatpush1.bf16.msra.mxu0 0
  %483 = vmatprep.subr.bf16.mxu0 0
  %484 = vmatpush1.bf16.msra.mxu0 0
  %485 = vmatprep.subr.bf16.mxu0 0
  %486 = vmatpush1.bf16.msra.mxu0 0
  %487 = vmatprep.subr.bf16.mxu0 0
  %488 = vmatpush1.bf16.msra.mxu0 0
  %489 = vmatprep.subr.bf16.mxu0 0
  %490 = vmatpush1.bf16.msra.mxu0 0
  %491 = vmatprep.subr.bf16.mxu0 0
  %492 = vmatpush1.bf16.msra.mxu0 0
  %493 = vmatprep.subr.bf16.mxu0 0
  %494 = vmatpush1.bf16.msra.mxu0 0
  %495 = vmatprep.subr.bf16.mxu0 0
  %496 = vmatpush1.bf16.msra.mxu0 0
  %497 = vmatprep.subr.bf16.mxu0 0
  %498 = vmatpush1.bf16.msra.mxu0 0
  %499 = vmatprep.subr.bf16.mxu0 0
  %500 = vmatpush1.bf16.msra.mxu0 0
  %501 = vmatprep.mubr.bf16.mxu0 0
  %502 = vmatmul.mubr.bf16.gmra.mrb[0].mxu0 %v458
  %v503 = vpop.f32.mrb[0].mxu0
  %v504 = vadd.f32 0.0, %v503
  %v505 = vpop.f32.mrb[0].mxu0
  %v506 = vadd.f32 0.0, %v505
  %v507 = vpop.f32.mrb[0].mxu0
  %v508 = vpop.f32.mrb[0].mxu0
  %509 = vdwg.mxu0
  %510 = vmatprep.subr.bf16.mxu0 0
  %511 = vmatpush1.bf16.msra.mxu0 %v467
  %512 = vmatprep.subr.bf16.mxu0 0
  %513 = vmatpush1.bf16.msra.mxu0 0
  %514 = vmatprep.subr.bf16.mxu0 0
  %515 = vmatpush1.bf16.msra.mxu0 0
  %516 = vmatprep.subr.bf16.mxu0 0
  %517 = vmatpush1.bf16.msra.mxu0 0
  %518 = vmatprep.subr.bf16.mxu0 0
  %519 = vmatpush1.bf16.msra.mxu0 0
  %520 = vmatprep.subr.bf16.mxu0 0
  %521 = vmatpush1.bf16.msra.mxu0 0
  %522 = vmatprep.subr.bf16.mxu0 0
  %523 = vmatpush1.bf16.msra.mxu0 0
  %524 = vmatprep.subr.bf16.mxu0 0
  %525 = vmatpush1.bf16.msra.mxu0 0
  %526 = vmatprep.subr.bf16.mxu0 0
  %527 = vmatpush1.bf16.msra.mxu0 0
  %528 = vmatprep.subr.bf16.mxu0 0
  %529 = vmatpush1.bf16.msra.mxu0 0
  %530 = vmatprep.subr.bf16.mxu0 0
  %531 = vmatpush1.bf16.msra.mxu0 0
  %532 = vmatprep.subr.bf16.mxu0 0
  %533 = vmatpush1.bf16.msra.mxu0 0
  %534 = vmatprep.subr.bf16.mxu0 0
  %535 = vmatpush1.bf16.msra.mxu0 0
  %536 = vmatprep.subr.bf16.mxu0 0
  %537 = vmatpush1.bf16.msra.mxu0 0
  %538 = vmatprep.subr.bf16.mxu0 0
  %539 = vmatpush1.bf16.msra.mxu0 0
  %540 = vmatprep.subr.bf16.mxu0 0
  %541 = vmatpush1.bf16.msra.mxu0 0
  %542 = vmatprep.mubr.bf16.mxu0 0
  %543 = vmatmul.mubr.bf16.gmra.mrb[0].mxu0 %v458
  %v544 = vpop.f32.mrb[0].mxu0
  %v545 = vadd.f32 0.0, %v544
  %v546 = vpop.f32.mrb[0].mxu0
  %v547 = vpop.f32.mrb[0].mxu0
  %v548 = vpop.f32.mrb[0].mxu0
  %549 = vdwg.mxu0
  %v550 = vadd.f32 %v443, %v504
  %v551 = vadd.f32 %v444, %v506
  %v552 = vadd.f32 %v445, %v545
  %s553 = scalar_lea.vmem %s1, 20
  %v554 = vld [vmem:[%s553] sm:$0xf]
  %555 = vrot.lane.b32.xlu0 %v32, 108
  %v556 = vpop.permute.xlu0 %555
  %557 = vrot.lane.b32.xlu0 %v33, 108
  %v558 = vpop.permute.xlu0 %557
  %559 = vrot.lane.b32.xlu0 %v34, 108
  %v560 = vpop.permute.xlu0 %559
  %vm561 = vcmask 883712
  %v562 = vsel %vm561, %v556, %v558
  %v563 = vsel %vm561, %v558, %v560
  %v565 = vsel %vm44, %v554, 0
  %v568 = vsel %vm48, %v562, 0
  %v571 = vsel %vm48, %v563, 0
  %v574 = vsel %vm48, %v560, 0
  %576 = vmatprep.subr.bf16.mxu0 %v571
  %577 = vmatpush1.bf16.msra.mxu0 %v568
  %578 = vmatprep.subr.bf16.mxu0 0
  %579 = vmatpush1.bf16.msra.mxu0 0
  %580 = vmatprep.subr.bf16.mxu0 0
  %581 = vmatpush1.bf16.msra.mxu0 0
  %582 = vmatprep.subr.bf16.mxu0 0
  %583 = vmatpush1.bf16.msra.mxu0 0
  %584 = vmatprep.subr.bf16.mxu0 0
  %585 = vmatpush1.bf16.msra.mxu0 0
  %586 = vmatprep.subr.bf16.mxu0 0
  %587 = vmatpush1.bf16.msra.mxu0 0
  %588 = vmatprep.subr.bf16.mxu0 0
  %589 = vmatpush1.bf16.msra.mxu0 0
  %590 = vmatprep.subr.bf16.mxu0 0
  %591 = vmatpush1.bf16.msra.mxu0 0
  %592 = vmatprep.subr.bf16.mxu0 0
  %593 = vmatpush1.bf16.msra.mxu0 0
  %594 = vmatprep.subr.bf16.mxu0 0
  %595 = vmatpush1.bf16.msra.mxu0 0
  %596 = vmatprep.subr.bf16.mxu0 0
  %597 = vmatpush1.bf16.msra.mxu0 0
  %598 = vmatprep.subr.bf16.mxu0 0
  %599 = vmatpush1.bf16.msra.mxu0 0
  %600 = vmatprep.subr.bf16.mxu0 0
  %601 = vmatpush1.bf16.msra.mxu0 0
  %602 = vmatprep.subr.bf16.mxu0 0
  %603 = vmatpush1.bf16.msra.mxu0 0
  %604 = vmatprep.subr.bf16.mxu0 0
  %605 = vmatpush1.bf16.msra.mxu0 0
  %606 = vmatprep.subr.bf16.mxu0 0
  %607 = vmatpush1.bf16.msra.mxu0 0
  %608 = vmatprep.mubr.bf16.mxu0 0
  %609 = vmatmul.mubr.bf16.gmra.mrb[0].mxu0 %v565
  %v610 = vpop.f32.mrb[0].mxu0
  %v611 = vadd.f32 0.0, %v610
  %v612 = vpop.f32.mrb[0].mxu0
  %v613 = vadd.f32 0.0, %v612
  %v614 = vpop.f32.mrb[0].mxu0
  %v615 = vpop.f32.mrb[0].mxu0
  %616 = vdwg.mxu0
  %617 = vmatprep.subr.bf16.mxu0 0
  %618 = vmatpush1.bf16.msra.mxu0 %v574
  %619 = vmatprep.subr.bf16.mxu0 0
  %620 = vmatpush1.bf16.msra.mxu0 0
  %621 = vmatprep.subr.bf16.mxu0 0
  %622 = vmatpush1.bf16.msra.mxu0 0
  %623 = vmatprep.subr.bf16.mxu0 0
  %624 = vmatpush1.bf16.msra.mxu0 0
  %625 = vmatprep.subr.bf16.mxu0 0
  %626 = vmatpush1.bf16.msra.mxu0 0
  %627 = vmatprep.subr.bf16.mxu0 0
  %628 = vmatpush1.bf16.msra.mxu0 0
  %629 = vmatprep.subr.bf16.mxu0 0
  %630 = vmatpush1.bf16.msra.mxu0 0
  %631 = vmatprep.subr.bf16.mxu0 0
  %632 = vmatpush1.bf16.msra.mxu0 0
  %633 = vmatprep.subr.bf16.mxu0 0
  %634 = vmatpush1.bf16.msra.mxu0 0
  %635 = vmatprep.subr.bf16.mxu0 0
  %636 = vmatpush1.bf16.msra.mxu0 0
  %637 = vmatprep.subr.bf16.mxu0 0
  %638 = vmatpush1.bf16.msra.mxu0 0
  %639 = vmatprep.subr.bf16.mxu0 0
  %640 = vmatpush1.bf16.msra.mxu0 0
  %641 = vmatprep.subr.bf16.mxu0 0
  %642 = vmatpush1.bf16.msra.mxu0 0
  %643 = vmatprep.subr.bf16.mxu0 0
  %644 = vmatpush1.bf16.msra.mxu0 0
  %645 = vmatprep.subr.bf16.mxu0 0
  %646 = vmatpush1.bf16.msra.mxu0 0
  %647 = vmatprep.subr.bf16.mxu0 0
  %648 = vmatpush1.bf16.msra.mxu0 0
  %649 = vmatprep.mubr.bf16.mxu0 0
  %650 = vmatmul.mubr.bf16.gmra.mrb[0].mxu0 %v565
  %v651 = vpop.f32.mrb[0].mxu0
  %v652 = vadd.f32 0.0, %v651
  %v653 = vpop.f32.mrb[0].mxu0
  %v654 = vpop.f32.mrb[0].mxu0
  %v655 = vpop.f32.mrb[0].mxu0
  %656 = vdwg.mxu0
  %v657 = vadd.f32 %v550, %v611
  %v658 = vadd.f32 %v551, %v613
  %v659 = vadd.f32 %v552, %v652
  %s660 = scalar_lea.vmem %s1, 24
  %v661 = vld [vmem:[%s660] sm:$0xf]
  %662 = vrot.lane.b32.xlu0 %v32, 92
  %v663 = vpop.permute.xlu0 %662
  %664 = vrot.lane.b32.xlu0 %v33, 92
  %v665 = vpop.permute.xlu0 %664
  %666 = vrot.lane.b32.xlu0 %v34, 92
  %v667 = vpop.permute.xlu0 %666
  %vm668 = vcmask 752640
  %v669 = vsel %vm668, %v663, %v665
  %v670 = vsel %vm668, %v665, %v667
  %v672 = vsel %vm44, %v661, 0
  %v675 = vsel %vm48, %v669, 0
  %v678 = vsel %vm48, %v670, 0
  %v681 = vsel %vm48, %v667, 0
  %683 = vmatprep.subr.bf16.mxu0 %v678
  %684 = vmatpush1.bf16.msra.mxu0 %v675
  %685 = vmatprep.subr.bf16.mxu0 0
  %686 = vmatpush1.bf16.msra.mxu0 0
  %687 = vmatprep.subr.bf16.mxu0 0
  %688 = vmatpush1.bf16.msra.mxu0 0
  %689 = vmatprep.subr.bf16.mxu0 0
  %690 = vmatpush1.bf16.msra.mxu0 0
  %691 = vmatprep.subr.bf16.mxu0 0
  %692 = vmatpush1.bf16.msra.mxu0 0
  %693 = vmatprep.subr.bf16.mxu0 0
  %694 = vmatpush1.bf16.msra.mxu0 0
  %695 = vmatprep.subr.bf16.mxu0 0
  %696 = vmatpush1.bf16.msra.mxu0 0
  %697 = vmatprep.subr.bf16.mxu0 0
  %698 = vmatpush1.bf16.msra.mxu0 0
  %699 = vmatprep.subr.bf16.mxu0 0
  %700 = vmatpush1.bf16.msra.mxu0 0
  %701 = vmatprep.subr.bf16.mxu0 0
  %702 = vmatpush1.bf16.msra.mxu0 0
  %703 = vmatprep.subr.bf16.mxu0 0
  %704 = vmatpush1.bf16.msra.mxu0 0
  %705 = vmatprep.subr.bf16.mxu0 0
  %706 = vmatpush1.bf16.msra.mxu0 0
  %707 = vmatprep.subr.bf16.mxu0 0
  %708 = vmatpush1.bf16.msra.mxu0 0
  %709 = vmatprep.subr.bf16.mxu0 0
  %710 = vmatpush1.bf16.msra.mxu0 0
  %711 = vmatprep.subr.bf16.mxu0 0
  %712 = vmatpush1.bf16.msra.mxu0 0
  %713 = vmatprep.subr.bf16.mxu0 0
  %714 = vmatpush1.bf16.msra.mxu0 0
  %715 = vmatprep.mubr.bf16.mxu0 0
  %716 = vmatmul.mubr.bf16.gmra.mrb[0].mxu0 %v672
  %v717 = vpop.f32.mrb[0].mxu0
  %v718 = vadd.f32 0.0, %v717
  %v719 = vpop.f32.mrb[0].mxu0
  %v720 = vadd.f32 0.0, %v719
  %v721 = vpop.f32.mrb[0].mxu0
  %v722 = vpop.f32.mrb[0].mxu0
  %723 = vdwg.mxu0
  %724 = vmatprep.subr.bf16.mxu0 0
  %725 = vmatpush1.bf16.msra.mxu0 %v681
  %726 = vmatprep.subr.bf16.mxu0 0
  %727 = vmatpush1.bf16.msra.mxu0 0
  %728 = vmatprep.subr.bf16.mxu0 0
  %729 = vmatpush1.bf16.msra.mxu0 0
  %730 = vmatprep.subr.bf16.mxu0 0
  %731 = vmatpush1.bf16.msra.mxu0 0
  %732 = vmatprep.subr.bf16.mxu0 0
  %733 = vmatpush1.bf16.msra.mxu0 0
  %734 = vmatprep.subr.bf16.mxu0 0
  %735 = vmatpush1.bf16.msra.mxu0 0
  %736 = vmatprep.subr.bf16.mxu0 0
  %737 = vmatpush1.bf16.msra.mxu0 0
  %738 = vmatprep.subr.bf16.mxu0 0
  %739 = vmatpush1.bf16.msra.mxu0 0
  %740 = vmatprep.subr.bf16.mxu0 0
  %741 = vmatpush1.bf16.msra.mxu0 0
  %742 = vmatprep.subr.bf16.mxu0 0
  %743 = vmatpush1.bf16.msra.mxu0 0
  %744 = vmatprep.subr.bf16.mxu0 0
  %745 = vmatpush1.bf16.msra.mxu0 0
  %746 = vmatprep.subr.bf16.mxu0 0
  %747 = vmatpush1.bf16.msra.mxu0 0
  %748 = vmatprep.subr.bf16.mxu0 0
  %749 = vmatpush1.bf16.msra.mxu0 0
  %750 = vmatprep.subr.bf16.mxu0 0
  %751 = vmatpush1.bf16.msra.mxu0 0
  %752 = vmatprep.subr.bf16.mxu0 0
  %753 = vmatpush1.bf16.msra.mxu0 0
  %754 = vmatprep.subr.bf16.mxu0 0
  %755 = vmatpush1.bf16.msra.mxu0 0
  %756 = vmatprep.mubr.bf16.mxu0 0
  %757 = vmatmul.mubr.bf16.gmra.mrb[0].mxu0 %v672
  %v758 = vpop.f32.mrb[0].mxu0
  %v759 = vadd.f32 0.0, %v758
  %v760 = vpop.f32.mrb[0].mxu0
  %v761 = vpop.f32.mrb[0].mxu0
  %v762 = vpop.f32.mrb[0].mxu0
  %763 = vdwg.mxu0
  %v764 = vadd.f32 %v657, %v718
  %v765 = vadd.f32 %v658, %v720
  %v766 = vadd.f32 %v659, %v759
  %s767 = scalar_lea.vmem %s1, 28
  %v768 = vld [vmem:[%s767] sm:$0xf]
  %769 = vrot.lane.b32.xlu0 %v32, 91
  %v770 = vpop.permute.xlu0 %769
  %771 = vrot.lane.b32.xlu0 %v33, 91
  %v772 = vpop.permute.xlu0 %771
  %773 = vrot.lane.b32.xlu0 %v34, 91
  %v774 = vpop.permute.xlu0 %773
  %vm775 = vcmask 744448
  %v776 = vsel %vm775, %v770, %v772
  %v777 = vsel %vm775, %v772, %v774
  %v779 = vsel %vm44, %v768, 0
  %v782 = vsel %vm48, %v776, 0
  %v785 = vsel %vm48, %v777, 0
  %v788 = vsel %vm48, %v774, 0
  %790 = vmatprep.subr.bf16.mxu0 %v785
  %791 = vmatpush1.bf16.msra.mxu0 %v782
  %792 = vmatprep.subr.bf16.mxu0 0
  %793 = vmatpush1.bf16.msra.mxu0 0
  %794 = vmatprep.subr.bf16.mxu0 0
  %795 = vmatpush1.bf16.msra.mxu0 0
  %796 = vmatprep.subr.bf16.mxu0 0
  %797 = vmatpush1.bf16.msra.mxu0 0
  %798 = vmatprep.subr.bf16.mxu0 0
  %799 = vmatpush1.bf16.msra.mxu0 0
  %800 = vmatprep.subr.bf16.mxu0 0
  %801 = vmatpush1.bf16.msra.mxu0 0
  %802 = vmatprep.subr.bf16.mxu0 0
  %803 = vmatpush1.bf16.msra.mxu0 0
  %804 = vmatprep.subr.bf16.mxu0 0
  %805 = vmatpush1.bf16.msra.mxu0 0
  %806 = vmatprep.subr.bf16.mxu0 0
  %807 = vmatpush1.bf16.msra.mxu0 0
  %808 = vmatprep.subr.bf16.mxu0 0
  %809 = vmatpush1.bf16.msra.mxu0 0
  %810 = vmatprep.subr.bf16.mxu0 0
  %811 = vmatpush1.bf16.msra.mxu0 0
  %812 = vmatprep.subr.bf16.mxu0 0
  %813 = vmatpush1.bf16.msra.mxu0 0
  %814 = vmatprep.subr.bf16.mxu0 0
  %815 = vmatpush1.bf16.msra.mxu0 0
  %816 = vmatprep.subr.bf16.mxu0 0
  %817 = vmatpush1.bf16.msra.mxu0 0
  %818 = vmatprep.subr.bf16.mxu0 0
  %819 = vmatpush1.bf16.msra.mxu0 0
  %820 = vmatprep.subr.bf16.mxu0 0
  %821 = vmatpush1.bf16.msra.mxu0 0
  %822 = vmatprep.mubr.bf16.mxu0 0
  %823 = vmatmul.mubr.bf16.gmra.mrb[0].mxu0 %v779
  %v824 = vpop.f32.mrb[0].mxu0
  %v825 = vadd.f32 0.0, %v824
  %v826 = vpop.f32.mrb[0].mxu0
  %v827 = vadd.f32 0.0, %v826
  %v828 = vpop.f32.mrb[0].mxu0
  %v829 = vpop.f32.mrb[0].mxu0
  %830 = vdwg.mxu0
  %831 = vmatprep.subr.bf16.mxu0 0
  %832 = vmatpush1.bf16.msra.mxu0 %v788
  %833 = vmatprep.subr.bf16.mxu0 0
  %834 = vmatpush1.bf16.msra.mxu0 0
  %835 = vmatprep.subr.bf16.mxu0 0
  %836 = vmatpush1.bf16.msra.mxu0 0
  %837 = vmatprep.subr.bf16.mxu0 0
  %838 = vmatpush1.bf16.msra.mxu0 0
  %839 = vmatprep.subr.bf16.mxu0 0
  %840 = vmatpush1.bf16.msra.mxu0 0
  %841 = vmatprep.subr.bf16.mxu0 0
  %842 = vmatpush1.bf16.msra.mxu0 0
  %843 = vmatprep.subr.bf16.mxu0 0
  %844 = vmatpush1.bf16.msra.mxu0 0
  %845 = vmatprep.subr.bf16.mxu0 0
  %846 = vmatpush1.bf16.msra.mxu0 0
  %847 = vmatprep.subr.bf16.mxu0 0
  %848 = vmatpush1.bf16.msra.mxu0 0
  %849 = vmatprep.subr.bf16.mxu0 0
  %850 = vmatpush1.bf16.msra.mxu0 0
  %851 = vmatprep.subr.bf16.mxu0 0
  %852 = vmatpush1.bf16.msra.mxu0 0
  %853 = vmatprep.subr.bf16.mxu0 0
  %854 = vmatpush1.bf16.msra.mxu0 0
  %855 = vmatprep.subr.bf16.mxu0 0
  %856 = vmatpush1.bf16.msra.mxu0 0
  %857 = vmatprep.subr.bf16.mxu0 0
  %858 = vmatpush1.bf16.msra.mxu0 0
  %859 = vmatprep.subr.bf16.mxu0 0
  %860 = vmatpush1.bf16.msra.mxu0 0
  %861 = vmatprep.subr.bf16.mxu0 0
  %862 = vmatpush1.bf16.msra.mxu0 0
  %863 = vmatprep.mubr.bf16.mxu0 0
  %864 = vmatmul.mubr.bf16.gmra.mrb[0].mxu0 %v779
  %v865 = vpop.f32.mrb[0].mxu0
  %v866 = vadd.f32 0.0, %v865
  %v867 = vpop.f32.mrb[0].mxu0
  %v868 = vpop.f32.mrb[0].mxu0
  %v869 = vpop.f32.mrb[0].mxu0
  %870 = vdwg.mxu0
  %v871 = vadd.f32 %v764, %v825
  %v872 = vadd.f32 %v765, %v827
  %v873 = vadd.f32 %v766, %v866
  %s874 = scalar_lea.vmem %s1, 32
  %v875 = vld [vmem:[%s874] sm:$0xf]
  %876 = vrot.lane.b32.xlu0 %v32, 90
  %v877 = vpop.permute.xlu0 %876
  %878 = vrot.lane.b32.xlu0 %v33, 90
  %v879 = vpop.permute.xlu0 %878
  %880 = vrot.lane.b32.xlu0 %v34, 90
  %v881 = vpop.permute.xlu0 %880
  %vm882 = vcmask 736256
  %v883 = vsel %vm882, %v877, %v879
  %v884 = vsel %vm882, %v879, %v881
  %v886 = vsel %vm44, %v875, 0
  %v889 = vsel %vm48, %v883, 0
  %v892 = vsel %vm48, %v884, 0
  %v895 = vsel %vm48, %v881, 0
  %897 = vmatprep.subr.bf16.mxu0 %v892
  %898 = vmatpush1.bf16.msra.mxu0 %v889
  %899 = vmatprep.subr.bf16.mxu0 0
  %900 = vmatpush1.bf16.msra.mxu0 0
  %901 = vmatprep.subr.bf16.mxu0 0
  %902 = vmatpush1.bf16.msra.mxu0 0
  %903 = vmatprep.subr.bf16.mxu0 0
  %904 = vmatpush1.bf16.msra.mxu0 0
  %905 = vmatprep.subr.bf16.mxu0 0
  %906 = vmatpush1.bf16.msra.mxu0 0
  %907 = vmatprep.subr.bf16.mxu0 0
  %908 = vmatpush1.bf16.msra.mxu0 0
  %909 = vmatprep.subr.bf16.mxu0 0
  %910 = vmatpush1.bf16.msra.mxu0 0
  %911 = vmatprep.subr.bf16.mxu0 0
  %912 = vmatpush1.bf16.msra.mxu0 0
  %913 = vmatprep.subr.bf16.mxu0 0
  %914 = vmatpush1.bf16.msra.mxu0 0
  %915 = vmatprep.subr.bf16.mxu0 0
  %916 = vmatpush1.bf16.msra.mxu0 0
  %917 = vmatprep.subr.bf16.mxu0 0
  %918 = vmatpush1.bf16.msra.mxu0 0
  %919 = vmatprep.subr.bf16.mxu0 0
  %920 = vmatpush1.bf16.msra.mxu0 0
  %921 = vmatprep.subr.bf16.mxu0 0
  %922 = vmatpush1.bf16.msra.mxu0 0
  %923 = vmatprep.subr.bf16.mxu0 0
  %924 = vmatpush1.bf16.msra.mxu0 0
  %925 = vmatprep.subr.bf16.mxu0 0
  %926 = vmatpush1.bf16.msra.mxu0 0
  %927 = vmatprep.subr.bf16.mxu0 0
  %928 = vmatpush1.bf16.msra.mxu0 0
  %929 = vmatprep.mubr.bf16.mxu0 0
  %930 = vmatmul.mubr.bf16.gmra.mrb[0].mxu0 %v886
  %v931 = vpop.f32.mrb[0].mxu0
  %v932 = vadd.f32 0.0, %v931
  %v933 = vpop.f32.mrb[0].mxu0
  %v934 = vadd.f32 0.0, %v933
  %v935 = vpop.f32.mrb[0].mxu0
  %v936 = vpop.f32.mrb[0].mxu0
  %937 = vdwg.mxu0
  %938 = vmatprep.subr.bf16.mxu0 0
  %939 = vmatpush1.bf16.msra.mxu0 %v895
  %940 = vmatprep.subr.bf16.mxu0 0
  %941 = vmatpush1.bf16.msra.mxu0 0
  %942 = vmatprep.subr.bf16.mxu0 0
  %943 = vmatpush1.bf16.msra.mxu0 0
  %944 = vmatprep.subr.bf16.mxu0 0
  %945 = vmatpush1.bf16.msra.mxu0 0
  %946 = vmatprep.subr.bf16.mxu0 0
  %947 = vmatpush1.bf16.msra.mxu0 0
  %948 = vmatprep.subr.bf16.mxu0 0
  %949 = vmatpush1.bf16.msra.mxu0 0
  %950 = vmatprep.subr.bf16.mxu0 0
  %951 = vmatpush1.bf16.msra.mxu0 0
  %952 = vmatprep.subr.bf16.mxu0 0
  %953 = vmatpush1.bf16.msra.mxu0 0
  %954 = vmatprep.subr.bf16.mxu0 0
  %955 = vmatpush1.bf16.msra.mxu0 0
  %956 = vmatprep.subr.bf16.mxu0 0
  %957 = vmatpush1.bf16.msra.mxu0 0
  %958 = vmatprep.subr.bf16.mxu0 0
  %959 = vmatpush1.bf16.msra.mxu0 0
  %960 = vmatprep.subr.bf16.mxu0 0
  %961 = vmatpush1.bf16.msra.mxu0 0
  %962 = vmatprep.subr.bf16.mxu0 0
  %963 = vmatpush1.bf16.msra.mxu0 0
  %964 = vmatprep.subr.bf16.mxu0 0
  %965 = vmatpush1.bf16.msra.mxu0 0
  %966 = vmatprep.subr.bf16.mxu0 0
  %967 = vmatpush1.bf16.msra.mxu0 0
  %968 = vmatprep.subr.bf16.mxu0 0
  %969 = vmatpush1.bf16.msra.mxu0 0
  %970 = vmatprep.mubr.bf16.mxu0 0
  %971 = vmatmul.mubr.bf16.gmra.mrb[0].mxu0 %v886
  %v972 = vpop.f32.mrb[0].mxu0
  %v973 = vadd.f32 0.0, %v972
  %v974 = vpop.f32.mrb[0].mxu0
  %v975 = vpop.f32.mrb[0].mxu0
  %v976 = vpop.f32.mrb[0].mxu0
  %977 = vdwg.mxu0
  %v978 = vadd.f32 %v871, %v932
  %v979 = vadd.f32 %v872, %v934
  %v980 = vadd.f32 %v873, %v973
  %s981 = scalar_lea.vmem %s0, 12
  %v982 = vld [vmem:[%s981] sm:$0xff]
  %v983 = vld [vmem:[%s981 + $0x8] sm:$0xf]
  %v986 = vunpack.c.l.b16 %v982
  %v987 = vunpack.c.h.b16 %v982
  %v988 = vunpack.c.l.b16 %v983
  %v989 = vpack.c.b16 %v986, %v986
  %v990 = vpack.c.b16 %v987, %v987
  %v991 = vpack.c.b16 %v988, %v988
  %992 = vrot.lane.b32.xlu0 %v989, 127
  %v993 = vpop.permute.xlu0 %992
  %994 = vrot.lane.b32.xlu0 %v990, 127
  %v995 = vpop.permute.xlu0 %994
  %996 = vrot.lane.b32.xlu0 %v991, 127
  %v997 = vpop.permute.xlu0 %996
  %v998 = vsel %vm41, %v993, %v995
  %v999 = vsel %vm41, %v995, %v997
  %v1001 = vsel %vm48, %v998, 0
  %v1004 = vsel %vm48, %v999, 0
  %v1007 = vsel %vm48, %v997, 0
  %1009 = vmatprep.subr.bf16.mxu0 %v1004
  %1010 = vmatpush1.bf16.msra.mxu0 %v1001
  %1011 = vmatprep.subr.bf16.mxu0 0
  %1012 = vmatpush1.bf16.msra.mxu0 0
  %1013 = vmatprep.subr.bf16.mxu0 0
  %1014 = vmatpush1.bf16.msra.mxu0 0
  %1015 = vmatprep.subr.bf16.mxu0 0
  %1016 = vmatpush1.bf16.msra.mxu0 0
  %1017 = vmatprep.subr.bf16.mxu0 0
  %1018 = vmatpush1.bf16.msra.mxu0 0
  %1019 = vmatprep.subr.bf16.mxu0 0
  %1020 = vmatpush1.bf16.msra.mxu0 0
  %1021 = vmatprep.subr.bf16.mxu0 0
  %1022 = vmatpush1.bf16.msra.mxu0 0
  %1023 = vmatprep.subr.bf16.mxu0 0
  %1024 = vmatpush1.bf16.msra.mxu0 0
  %1025 = vmatprep.subr.bf16.mxu0 0
  %1026 = vmatpush1.bf16.msra.mxu0 0
  %1027 = vmatprep.subr.bf16.mxu0 0
  %1028 = vmatpush1.bf16.msra.mxu0 0
  %1029 = vmatprep.subr.bf16.mxu0 0
  %1030 = vmatpush1.bf16.msra.mxu0 0
  %1031 = vmatprep.subr.bf16.mxu0 0
  %1032 = vmatpush1.bf16.msra.mxu0 0
  %1033 = vmatprep.subr.bf16.mxu0 0
  %1034 = vmatpush1.bf16.msra.mxu0 0
  %1035 = vmatprep.subr.bf16.mxu0 0
  %1036 = vmatpush1.bf16.msra.mxu0 0
  %1037 = vmatprep.subr.bf16.mxu0 0
  %1038 = vmatpush1.bf16.msra.mxu0 0
  %1039 = vmatprep.subr.bf16.mxu0 0
  %1040 = vmatpush1.bf16.msra.mxu0 0
  %1041 = vmatprep.mubr.bf16.mxu0 0
  %1042 = vmatmul.mubr.bf16.gmra.mrb[0].mxu0 %v46
  %v1043 = vpop.f32.mrb[0].mxu0
  %v1044 = vadd.f32 0.0, %v1043
  %v1045 = vpop.f32.mrb[0].mxu0
  %v1046 = vadd.f32 0.0, %v1045
  %v1047 = vpop.f32.mrb[0].mxu0
  %v1048 = vpop.f32.mrb[0].mxu0
  %1049 = vdwg.mxu0
  %1050 = vmatprep.subr.bf16.mxu0 0
  %1051 = vmatpush1.bf16.msra.mxu0 %v1007
  %1052 = vmatprep.subr.bf16.mxu0 0
  %1053 = vmatpush1.bf16.msra.mxu0 0
  %1054 = vmatprep.subr.bf16.mxu0 0
  %1055 = vmatpush1.bf16.msra.mxu0 0
  %1056 = vmatprep.subr.bf16.mxu0 0
  %1057 = vmatpush1.bf16.msra.mxu0 0
  %1058 = vmatprep.subr.bf16.mxu0 0
  %1059 = vmatpush1.bf16.msra.mxu0 0
  %1060 = vmatprep.subr.bf16.mxu0 0
  %1061 = vmatpush1.bf16.msra.mxu0 0
  %1062 = vmatprep.subr.bf16.mxu0 0
  %1063 = vmatpush1.bf16.msra.mxu0 0
  %1064 = vmatprep.subr.bf16.mxu0 0
  %1065 = vmatpush1.bf16.msra.mxu0 0
  %1066 = vmatprep.subr.bf16.mxu0 0
  %1067 = vmatpush1.bf16.msra.mxu0 0
  %1068 = vmatprep.subr.bf16.mxu0 0
  %1069 = vmatpush1.bf16.msra.mxu0 0
  %1070 = vmatprep.subr.bf16.mxu0 0
  %1071 = vmatpush1.bf16.msra.mxu0 0
  %1072 = vmatprep.subr.bf16.mxu0 0
  %1073 = vmatpush1.bf16.msra.mxu0 0
  %1074 = vmatprep.subr.bf16.mxu0 0
  %1075 = vmatpush1.bf16.msra.mxu0 0
  %1076 = vmatprep.subr.bf16.mxu0 0
  %1077 = vmatpush1.bf16.msra.mxu0 0
  %1078 = vmatprep.subr.bf16.mxu0 0
  %1079 = vmatpush1.bf16.msra.mxu0 0
  %1080 = vmatprep.subr.bf16.mxu0 0
  %1081 = vmatpush1.bf16.msra.mxu0 0
  %1082 = vmatprep.mubr.bf16.mxu0 0
  %1083 = vmatmul.mubr.bf16.gmra.mrb[0].mxu0 %v46
  %v1084 = vpop.f32.mrb[0].mxu0
  %v1085 = vadd.f32 0.0, %v1084
  %v1086 = vpop.f32.mrb[0].mxu0
  %v1087 = vpop.f32.mrb[0].mxu0
  %v1088 = vpop.f32.mrb[0].mxu0
  %1089 = vdwg.mxu0
  %v1091 = vsel %vm48, %v989, 0
  %v1094 = vsel %vm48, %v990, 0
  %v1097 = vsel %vm48, %v991, 0
  %1099 = vmatprep.subr.bf16.mxu0 %v1094
  %1100 = vmatpush1.bf16.msra.mxu0 %v1091
  %1101 = vmatprep.subr.bf16.mxu0 0
  %1102 = vmatpush1.bf16.msra.mxu0 0
  %1103 = vmatprep.subr.bf16.mxu0 0
  %1104 = vmatpush1.bf16.msra.mxu0 0
  %1105 = vmatprep.subr.bf16.mxu0 0
  %1106 = vmatpush1.bf16.msra.mxu0 0
  %1107 = vmatprep.subr.bf16.mxu0 0
  %1108 = vmatpush1.bf16.msra.mxu0 0
  %1109 = vmatprep.subr.bf16.mxu0 0
  %1110 = vmatpush1.bf16.msra.mxu0 0
  %1111 = vmatprep.subr.bf16.mxu0 0
  %1112 = vmatpush1.bf16.msra.mxu0 0
  %1113 = vmatprep.subr.bf16.mxu0 0
  %1114 = vmatpush1.bf16.msra.mxu0 0
  %1115 = vmatprep.subr.bf16.mxu0 0
  %1116 = vmatpush1.bf16.msra.mxu0 0
  %1117 = vmatprep.subr.bf16.mxu0 0
  %1118 = vmatpush1.bf16.msra.mxu0 0
  %1119 = vmatprep.subr.bf16.mxu0 0
  %1120 = vmatpush1.bf16.msra.mxu0 0
  %1121 = vmatprep.subr.bf16.mxu0 0
  %1122 = vmatpush1.bf16.msra.mxu0 0
  %1123 = vmatprep.subr.bf16.mxu0 0
  %1124 = vmatpush1.bf16.msra.mxu0 0
  %1125 = vmatprep.subr.bf16.mxu0 0
  %1126 = vmatpush1.bf16.msra.mxu0 0
  %1127 = vmatprep.subr.bf16.mxu0 0
  %1128 = vmatpush1.bf16.msra.mxu0 0
  %1129 = vmatprep.subr.bf16.mxu0 0
  %1130 = vmatpush1.bf16.msra.mxu0 0
  %1131 = vmatprep.mubr.bf16.mxu0 0
  %1132 = vmatmul.mubr.bf16.gmra.mrb[0].mxu0 %v140
  %v1133 = vpop.f32.mrb[0].mxu0
  %v1134 = vadd.f32 %v1044, %v1133
  %v1135 = vpop.f32.mrb[0].mxu0
  %v1136 = vadd.f32 %v1046, %v1135
  %v1137 = vpop.f32.mrb[0].mxu0
  %v1138 = vpop.f32.mrb[0].mxu0
  %1139 = vdwg.mxu0
  %1140 = vmatprep.subr.bf16.mxu0 0
  %1141 = vmatpush1.bf16.msra.mxu0 %v1097
  %1142 = vmatprep.subr.bf16.mxu0 0
  %1143 = vmatpush1.bf16.msra.mxu0 0
  %1144 = vmatprep.subr.bf16.mxu0 0
  %1145 = vmatpush1.bf16.msra.mxu0 0
  %1146 = vmatprep.subr.bf16.mxu0 0
  %1147 = vmatpush1.bf16.msra.mxu0 0
  %1148 = vmatprep.subr.bf16.mxu0 0
  %1149 = vmatpush1.bf16.msra.mxu0 0
  %1150 = vmatprep.subr.bf16.mxu0 0
  %1151 = vmatpush1.bf16.msra.mxu0 0
  %1152 = vmatprep.subr.bf16.mxu0 0
  %1153 = vmatpush1.bf16.msra.mxu0 0
  %1154 = vmatprep.subr.bf16.mxu0 0
  %1155 = vmatpush1.bf16.msra.mxu0 0
  %1156 = vmatprep.subr.bf16.mxu0 0
  %1157 = vmatpush1.bf16.msra.mxu0 0
  %1158 = vmatprep.subr.bf16.mxu0 0
  %1159 = vmatpush1.bf16.msra.mxu0 0
  %1160 = vmatprep.subr.bf16.mxu0 0
  %1161 = vmatpush1.bf16.msra.mxu0 0
  %1162 = vmatprep.subr.bf16.mxu0 0
  %1163 = vmatpush1.bf16.msra.mxu0 0
  %1164 = vmatprep.subr.bf16.mxu0 0
  %1165 = vmatpush1.bf16.msra.mxu0 0
  %1166 = vmatprep.subr.bf16.mxu0 0
  %1167 = vmatpush1.bf16.msra.mxu0 0
  %1168 = vmatprep.subr.bf16.mxu0 0
  %1169 = vmatpush1.bf16.msra.mxu0 0
  %1170 = vmatprep.subr.bf16.mxu0 0
  %1171 = vmatpush1.bf16.msra.mxu0 0
  %1172 = vmatprep.mubr.bf16.mxu0 0
  %1173 = vmatmul.mubr.bf16.gmra.mrb[0].mxu0 %v140
  %v1174 = vpop.f32.mrb[0].mxu0
  %v1175 = vadd.f32 %v1085, %v1174
  %v1176 = vpop.f32.mrb[0].mxu0
  %v1177 = vpop.f32.mrb[0].mxu0
  %v1178 = vpop.f32.mrb[0].mxu0
  %1179 = vdwg.mxu0
  %1180 = vrot.lane.b32.xlu0 %v989, 126
  %v1181 = vpop.permute.xlu0 %1180
  %1182 = vrot.lane.b32.xlu0 %v990, 126
  %v1183 = vpop.permute.xlu0 %1182
  %1184 = vrot.lane.b32.xlu0 %v991, 126
  %v1185 = vpop.permute.xlu0 %1184
  %v1186 = vsel %vm240, %v1181, %v1183
  %v1187 = vsel %vm240, %v1183, %v1185
  %v1189 = vsel %vm48, %v1186, 0
  %v1192 = vsel %vm48, %v1187, 0
  %v1195 = vsel %vm48, %v1185, 0
  %1197 = vmatprep.subr.bf16.mxu0 %v1192
  %1198 = vmatpush1.bf16.msra.mxu0 %v1189
  %1199 = vmatprep.subr.bf16.mxu0 0
  %1200 = vmatpush1.bf16.msra.mxu0 0
  %1201 = vmatprep.subr.bf16.mxu0 0
  %1202 = vmatpush1.bf16.msra.mxu0 0
  %1203 = vmatprep.subr.bf16.mxu0 0
  %1204 = vmatpush1.bf16.msra.mxu0 0
  %1205 = vmatprep.subr.bf16.mxu0 0
  %1206 = vmatpush1.bf16.msra.mxu0 0
  %1207 = vmatprep.subr.bf16.mxu0 0
  %1208 = vmatpush1.bf16.msra.mxu0 0
  %1209 = vmatprep.subr.bf16.mxu0 0
  %1210 = vmatpush1.bf16.msra.mxu0 0
  %1211 = vmatprep.subr.bf16.mxu0 0
  %1212 = vmatpush1.bf16.msra.mxu0 0
  %1213 = vmatprep.subr.bf16.mxu0 0
  %1214 = vmatpush1.bf16.msra.mxu0 0
  %1215 = vmatprep.subr.bf16.mxu0 0
  %1216 = vmatpush1.bf16.msra.mxu0 0
  %1217 = vmatprep.subr.bf16.mxu0 0
  %1218 = vmatpush1.bf16.msra.mxu0 0
  %1219 = vmatprep.subr.bf16.mxu0 0
  %1220 = vmatpush1.bf16.msra.mxu0 0
  %1221 = vmatprep.subr.bf16.mxu0 0
  %1222 = vmatpush1.bf16.msra.mxu0 0
  %1223 = vmatprep.subr.bf16.mxu0 0
  %1224 = vmatpush1.bf16.msra.mxu0 0
  %1225 = vmatprep.subr.bf16.mxu0 0
  %1226 = vmatpush1.bf16.msra.mxu0 0
  %1227 = vmatprep.subr.bf16.mxu0 0
  %1228 = vmatpush1.bf16.msra.mxu0 0
  %1229 = vmatprep.mubr.bf16.mxu0 0
  %1230 = vmatmul.mubr.bf16.gmra.mrb[0].mxu0 %v244
  %v1231 = vpop.f32.mrb[0].mxu0
  %v1232 = vadd.f32 0.0, %v1231
  %v1233 = vpop.f32.mrb[0].mxu0
  %v1234 = vadd.f32 0.0, %v1233
  %v1235 = vpop.f32.mrb[0].mxu0
  %v1236 = vpop.f32.mrb[0].mxu0
  %1237 = vdwg.mxu0
  %1238 = vmatprep.subr.bf16.mxu0 0
  %1239 = vmatpush1.bf16.msra.mxu0 %v1195
  %1240 = vmatprep.subr.bf16.mxu0 0
  %1241 = vmatpush1.bf16.msra.mxu0 0
  %1242 = vmatprep.subr.bf16.mxu0 0
  %1243 = vmatpush1.bf16.msra.mxu0 0
  %1244 = vmatprep.subr.bf16.mxu0 0
  %1245 = vmatpush1.bf16.msra.mxu0 0
  %1246 = vmatprep.subr.bf16.mxu0 0
  %1247 = vmatpush1.bf16.msra.mxu0 0
  %1248 = vmatprep.subr.bf16.mxu0 0
  %1249 = vmatpush1.bf16.msra.mxu0 0
  %1250 = vmatprep.subr.bf16.mxu0 0
  %1251 = vmatpush1.bf16.msra.mxu0 0
  %1252 = vmatprep.subr.bf16.mxu0 0
  %1253 = vmatpush1.bf16.msra.mxu0 0
  %1254 = vmatprep.subr.bf16.mxu0 0
  %1255 = vmatpush1.bf16.msra.mxu0 0
  %1256 = vmatprep.subr.bf16.mxu0 0
  %1257 = vmatpush1.bf16.msra.mxu0 0
  %1258 = vmatprep.subr.bf16.mxu0 0
  %1259 = vmatpush1.bf16.msra.mxu0 0
  %1260 = vmatprep.subr.bf16.mxu0 0
  %1261 = vmatpush1.bf16.msra.mxu0 0
  %1262 = vmatprep.subr.bf16.mxu0 0
  %1263 = vmatpush1.bf16.msra.mxu0 0
  %1264 = vmatprep.subr.bf16.mxu0 0
  %1265 = vmatpush1.bf16.msra.mxu0 0
  %1266 = vmatprep.subr.bf16.mxu0 0
  %1267 = vmatpush1.bf16.msra.mxu0 0
  %1268 = vmatprep.subr.bf16.mxu0 0
  %1269 = vmatpush1.bf16.msra.mxu0 0
  %1270 = vmatprep.mubr.bf16.mxu0 0
  %1271 = vmatmul.mubr.bf16.gmra.mrb[0].mxu0 %v244
  %v1272 = vpop.f32.mrb[0].mxu0
  %v1273 = vadd.f32 0.0, %v1272
  %v1274 = vpop.f32.mrb[0].mxu0
  %v1275 = vpop.f32.mrb[0].mxu0
  %v1276 = vpop.f32.mrb[0].mxu0
  %1277 = vdwg.mxu0
  %v1278 = vadd.f32 %v1134, %v1232
  %v1279 = vadd.f32 %v1136, %v1234
  %v1280 = vadd.f32 %v1175, %v1273
  %1281 = vrot.lane.b32.xlu0 %v989, 110
  %v1282 = vpop.permute.xlu0 %1281
  %1283 = vrot.lane.b32.xlu0 %v990, 110
  %v1284 = vpop.permute.xlu0 %1283
  %1285 = vrot.lane.b32.xlu0 %v991, 110
  %v1286 = vpop.permute.xlu0 %1285
  %v1287 = vsel %vm347, %v1282, %v1284
  %v1288 = vsel %vm347, %v1284, %v1286
  %v1290 = vsel %vm48, %v1287, 0
  %v1293 = vsel %vm48, %v1288, 0
  %v1296 = vsel %vm48, %v1286, 0
  %1298 = vmatprep.subr.bf16.mxu0 %v1293
  %1299 = vmatpush1.bf16.msra.mxu0 %v1290
  %1300 = vmatprep.subr.bf16.mxu0 0
  %1301 = vmatpush1.bf16.msra.mxu0 0
  %1302 = vmatprep.subr.bf16.mxu0 0
  %1303 = vmatpush1.bf16.msra.mxu0 0
  %1304 = vmatprep.subr.bf16.mxu0 0
  %1305 = vmatpush1.bf16.msra.mxu0 0
  %1306 = vmatprep.subr.bf16.mxu0 0
  %1307 = vmatpush1.bf16.msra.mxu0 0
  %1308 = vmatprep.subr.bf16.mxu0 0
  %1309 = vmatpush1.bf16.msra.mxu0 0
  %1310 = vmatprep.subr.bf16.mxu0 0
  %1311 = vmatpush1.bf16.msra.mxu0 0
  %1312 = vmatprep.subr.bf16.mxu0 0
  %1313 = vmatpush1.bf16.msra.mxu0 0
  %1314 = vmatprep.subr.bf16.mxu0 0
  %1315 = vmatpush1.bf16.msra.mxu0 0
  %1316 = vmatprep.subr.bf16.mxu0 0
  %1317 = vmatpush1.bf16.msra.mxu0 0
  %1318 = vmatprep.subr.bf16.mxu0 0
  %1319 = vmatpush1.bf16.msra.mxu0 0
  %1320 = vmatprep.subr.bf16.mxu0 0
  %1321 = vmatpush1.bf16.msra.mxu0 0
  %1322 = vmatprep.subr.bf16.mxu0 0
  %1323 = vmatpush1.bf16.msra.mxu0 0
  %1324 = vmatprep.subr.bf16.mxu0 0
  %1325 = vmatpush1.bf16.msra.mxu0 0
  %1326 = vmatprep.subr.bf16.mxu0 0
  %1327 = vmatpush1.bf16.msra.mxu0 0
  %1328 = vmatprep.subr.bf16.mxu0 0
  %1329 = vmatpush1.bf16.msra.mxu0 0
  %1330 = vmatprep.mubr.bf16.mxu0 0
  %1331 = vmatmul.mubr.bf16.gmra.mrb[0].mxu0 %v351
  %v1332 = vpop.f32.mrb[0].mxu0
  %v1333 = vadd.f32 0.0, %v1332
  %v1334 = vpop.f32.mrb[0].mxu0
  %v1335 = vadd.f32 0.0, %v1334
  %v1336 = vpop.f32.mrb[0].mxu0
  %v1337 = vpop.f32.mrb[0].mxu0
  %1338 = vdwg.mxu0
  %1339 = vmatprep.subr.bf16.mxu0 0
  %1340 = vmatpush1.bf16.msra.mxu0 %v1296
  %1341 = vmatprep.subr.bf16.mxu0 0
  %1342 = vmatpush1.bf16.msra.mxu0 0
  %1343 = vmatprep.subr.bf16.mxu0 0
  %1344 = vmatpush1.bf16.msra.mxu0 0
  %1345 = vmatprep.subr.bf16.mxu0 0
  %1346 = vmatpush1.bf16.msra.mxu0 0
  %1347 = vmatprep.subr.bf16.mxu0 0
  %1348 = vmatpush1.bf16.msra.mxu0 0
  %1349 = vmatprep.subr.bf16.mxu0 0
  %1350 = vmatpush1.bf16.msra.mxu0 0
  %1351 = vmatprep.subr.bf16.mxu0 0
  %1352 = vmatpush1.bf16.msra.mxu0 0
  %1353 = vmatprep.subr.bf16.mxu0 0
  %1354 = vmatpush1.bf16.msra.mxu0 0
  %1355 = vmatprep.subr.bf16.mxu0 0
  %1356 = vmatpush1.bf16.msra.mxu0 0
  %1357 = vmatprep.subr.bf16.mxu0 0
  %1358 = vmatpush1.bf16.msra.mxu0 0
  %1359 = vmatprep.subr.bf16.mxu0 0
  %1360 = vmatpush1.bf16.msra.mxu0 0
  %1361 = vmatprep.subr.bf16.mxu0 0
  %1362 = vmatpush1.bf16.msra.mxu0 0
  %1363 = vmatprep.subr.bf16.mxu0 0
  %1364 = vmatpush1.bf16.msra.mxu0 0
  %1365 = vmatprep.subr.bf16.mxu0 0
  %1366 = vmatpush1.bf16.msra.mxu0 0
  %1367 = vmatprep.subr.bf16.mxu0 0
  %1368 = vmatpush1.bf16.msra.mxu0 0
  %1369 = vmatprep.subr.bf16.mxu0 0
  %1370 = vmatpush1.bf16.msra.mxu0 0
  %1371 = vmatprep.mubr.bf16.mxu0 0
  %1372 = vmatmul.mubr.bf16.gmra.mrb[0].mxu0 %v351
  %v1373 = vpop.f32.mrb[0].mxu0
  %v1374 = vadd.f32 0.0, %v1373
  %v1375 = vpop.f32.mrb[0].mxu0
  %v1376 = vpop.f32.mrb[0].mxu0
  %v1377 = vpop.f32.mrb[0].mxu0
  %1378 = vdwg.mxu0
  %v1379 = vadd.f32 %v1278, %v1333
  %v1380 = vadd.f32 %v1279, %v1335
  %v1381 = vadd.f32 %v1280, %v1374
  %1382 = vrot.lane.b32.xlu0 %v989, 109
  %v1383 = vpop.permute.xlu0 %1382
  %1384 = vrot.lane.b32.xlu0 %v990, 109
  %v1385 = vpop.permute.xlu0 %1384
  %1386 = vrot.lane.b32.xlu0 %v991, 109
  %v1387 = vpop.permute.xlu0 %1386
  %v1388 = vsel %vm454, %v1383, %v1385
  %v1389 = vsel %vm454, %v1385, %v1387
  %v1391 = vsel %vm48, %v1388, 0
  %v1394 = vsel %vm48, %v1389, 0
  %v1397 = vsel %vm48, %v1387, 0
  %1399 = vmatprep.subr.bf16.mxu0 %v1394
  %1400 = vmatpush1.bf16.msra.mxu0 %v1391
  %1401 = vmatprep.subr.bf16.mxu0 0
  %1402 = vmatpush1.bf16.msra.mxu0 0
  %1403 = vmatprep.subr.bf16.mxu0 0
  %1404 = vmatpush1.bf16.msra.mxu0 0
  %1405 = vmatprep.subr.bf16.mxu0 0
  %1406 = vmatpush1.bf16.msra.mxu0 0
  %1407 = vmatprep.subr.bf16.mxu0 0
  %1408 = vmatpush1.bf16.msra.mxu0 0
  %1409 = vmatprep.subr.bf16.mxu0 0
  %1410 = vmatpush1.bf16.msra.mxu0 0
  %1411 = vmatprep.subr.bf16.mxu0 0
  %1412 = vmatpush1.bf16.msra.mxu0 0
  %1413 = vmatprep.subr.bf16.mxu0 0
  %1414 = vmatpush1.bf16.msra.mxu0 0
  %1415 = vmatprep.subr.bf16.mxu0 0
  %1416 = vmatpush1.bf16.msra.mxu0 0
  %1417 = vmatprep.subr.bf16.mxu0 0
  %1418 = vmatpush1.bf16.msra.mxu0 0
  %1419 = vmatprep.subr.bf16.mxu0 0
  %1420 = vmatpush1.bf16.msra.mxu0 0
  %1421 = vmatprep.subr.bf16.mxu0 0
  %1422 = vmatpush1.bf16.msra.mxu0 0
  %1423 = vmatprep.subr.bf16.mxu0 0
  %1424 = vmatpush1.bf16.msra.mxu0 0
  %1425 = vmatprep.subr.bf16.mxu0 0
  %1426 = vmatpush1.bf16.msra.mxu0 0
  %1427 = vmatprep.subr.bf16.mxu0 0
  %1428 = vmatpush1.bf16.msra.mxu0 0
  %1429 = vmatprep.subr.bf16.mxu0 0
  %1430 = vmatpush1.bf16.msra.mxu0 0
  %1431 = vmatprep.mubr.bf16.mxu0 0
  %1432 = vmatmul.mubr.bf16.gmra.mrb[0].mxu0 %v458
  %v1433 = vpop.f32.mrb[0].mxu0
  %v1434 = vadd.f32 0.0, %v1433
  %v1435 = vpop.f32.mrb[0].mxu0
  %v1436 = vadd.f32 0.0, %v1435
  %v1437 = vpop.f32.mrb[0].mxu0
  %v1438 = vpop.f32.mrb[0].mxu0
  %1439 = vdwg.mxu0
  %1440 = vmatprep.subr.bf16.mxu0 0
  %1441 = vmatpush1.bf16.msra.mxu0 %v1397
  %1442 = vmatprep.subr.bf16.mxu0 0
  %1443 = vmatpush1.bf16.msra.mxu0 0
  %1444 = vmatprep.subr.bf16.mxu0 0
  %1445 = vmatpush1.bf16.msra.mxu0 0
  %1446 = vmatprep.subr.bf16.mxu0 0
  %1447 = vmatpush1.bf16.msra.mxu0 0
  %1448 = vmatprep.subr.bf16.mxu0 0
  %1449 = vmatpush1.bf16.msra.mxu0 0
  %1450 = vmatprep.subr.bf16.mxu0 0
  %1451 = vmatpush1.bf16.msra.mxu0 0
  %1452 = vmatprep.subr.bf16.mxu0 0
  %1453 = vmatpush1.bf16.msra.mxu0 0
  %1454 = vmatprep.subr.bf16.mxu0 0
  %1455 = vmatpush1.bf16.msra.mxu0 0
  %1456 = vmatprep.subr.bf16.mxu0 0
  %1457 = vmatpush1.bf16.msra.mxu0 0
  %1458 = vmatprep.subr.bf16.mxu0 0
  %1459 = vmatpush1.bf16.msra.mxu0 0
  %1460 = vmatprep.subr.bf16.mxu0 0
  %1461 = vmatpush1.bf16.msra.mxu0 0
  %1462 = vmatprep.subr.bf16.mxu0 0
  %1463 = vmatpush1.bf16.msra.mxu0 0
  %1464 = vmatprep.subr.bf16.mxu0 0
  %1465 = vmatpush1.bf16.msra.mxu0 0
  %1466 = vmatprep.subr.bf16.mxu0 0
  %1467 = vmatpush1.bf16.msra.mxu0 0
  %1468 = vmatprep.subr.bf16.mxu0 0
  %1469 = vmatpush1.bf16.msra.mxu0 0
  %1470 = vmatprep.subr.bf16.mxu0 0
  %1471 = vmatpush1.bf16.msra.mxu0 0
  %1472 = vmatprep.mubr.bf16.mxu0 0
  %1473 = vmatmul.mubr.bf16.gmra.mrb[0].mxu0 %v458
  %v1474 = vpop.f32.mrb[0].mxu0
  %v1475 = vadd.f32 0.0, %v1474
  %v1476 = vpop.f32.mrb[0].mxu0
  %v1477 = vpop.f32.mrb[0].mxu0
  %v1478 = vpop.f32.mrb[0].mxu0
  %1479 = vdwg.mxu0
  %v1480 = vadd.f32 %v1379, %v1434
  %v1481 = vadd.f32 %v1380, %v1436
  %v1482 = vadd.f32 %v1381, %v1475
  %1483 = vrot.lane.b32.xlu0 %v989, 108
  %v1484 = vpop.permute.xlu0 %1483
  %1485 = vrot.lane.b32.xlu0 %v990, 108
  %v1486 = vpop.permute.xlu0 %1485
  %1487 = vrot.lane.b32.xlu0 %v991, 108
  %v1488 = vpop.permute.xlu0 %1487
  %v1489 = vsel %vm561, %v1484, %v1486
  %v1490 = vsel %vm561, %v1486, %v1488
  %v1492 = vsel %vm48, %v1489, 0
  %v1495 = vsel %vm48, %v1490, 0
  %v1498 = vsel %vm48, %v1488, 0
  %1500 = vmatprep.subr.bf16.mxu0 %v1495
  %1501 = vmatpush1.bf16.msra.mxu0 %v1492
  %1502 = vmatprep.subr.bf16.mxu0 0
  %1503 = vmatpush1.bf16.msra.mxu0 0
  %1504 = vmatprep.subr.bf16.mxu0 0
  %1505 = vmatpush1.bf16.msra.mxu0 0
  %1506 = vmatprep.subr.bf16.mxu0 0
  %1507 = vmatpush1.bf16.msra.mxu0 0
  %1508 = vmatprep.subr.bf16.mxu0 0
  %1509 = vmatpush1.bf16.msra.mxu0 0
  %1510 = vmatprep.subr.bf16.mxu0 0
  %1511 = vmatpush1.bf16.msra.mxu0 0
  %1512 = vmatprep.subr.bf16.mxu0 0
  %1513 = vmatpush1.bf16.msra.mxu0 0
  %1514 = vmatprep.subr.bf16.mxu0 0
  %1515 = vmatpush1.bf16.msra.mxu0 0
  %1516 = vmatprep.subr.bf16.mxu0 0
  %1517 = vmatpush1.bf16.msra.mxu0 0
  %1518 = vmatprep.subr.bf16.mxu0 0
  %1519 = vmatpush1.bf16.msra.mxu0 0
  %1520 = vmatprep.subr.bf16.mxu0 0
  %1521 = vmatpush1.bf16.msra.mxu0 0
  %1522 = vmatprep.subr.bf16.mxu0 0
  %1523 = vmatpush1.bf16.msra.mxu0 0
  %1524 = vmatprep.subr.bf16.mxu0 0
  %1525 = vmatpush1.bf16.msra.mxu0 0
  %1526 = vmatprep.subr.bf16.mxu0 0
  %1527 = vmatpush1.bf16.msra.mxu0 0
  %1528 = vmatprep.subr.bf16.mxu0 0
  %1529 = vmatpush1.bf16.msra.mxu0 0
  %1530 = vmatprep.subr.bf16.mxu0 0
  %1531 = vmatpush1.bf16.msra.mxu0 0
  %1532 = vmatprep.mubr.bf16.mxu0 0
  %1533 = vmatmul.mubr.bf16.gmra.mrb[0].mxu0 %v565
  %v1534 = vpop.f32.mrb[0].mxu0
  %v1535 = vadd.f32 0.0, %v1534
  %v1536 = vpop.f32.mrb[0].mxu0
  %v1537 = vadd.f32 0.0, %v1536
  %v1538 = vpop.f32.mrb[0].mxu0
  %v1539 = vpop.f32.mrb[0].mxu0
  %1540 = vdwg.mxu0
  %1541 = vmatprep.subr.bf16.mxu0 0
  %1542 = vmatpush1.bf16.msra.mxu0 %v1498
  %1543 = vmatprep.subr.bf16.mxu0 0
  %1544 = vmatpush1.bf16.msra.mxu0 0
  %1545 = vmatprep.subr.bf16.mxu0 0
  %1546 = vmatpush1.bf16.msra.mxu0 0
  %1547 = vmatprep.subr.bf16.mxu0 0
  %1548 = vmatpush1.bf16.msra.mxu0 0
  %1549 = vmatprep.subr.bf16.mxu0 0
  %1550 = vmatpush1.bf16.msra.mxu0 0
  %1551 = vmatprep.subr.bf16.mxu0 0
  %1552 = vmatpush1.bf16.msra.mxu0 0
  %1553 = vmatprep.subr.bf16.mxu0 0
  %1554 = vmatpush1.bf16.msra.mxu0 0
  %1555 = vmatprep.subr.bf16.mxu0 0
  %1556 = vmatpush1.bf16.msra.mxu0 0
  %1557 = vmatprep.subr.bf16.mxu0 0
  %1558 = vmatpush1.bf16.msra.mxu0 0
  %1559 = vmatprep.subr.bf16.mxu0 0
  %1560 = vmatpush1.bf16.msra.mxu0 0
  %1561 = vmatprep.subr.bf16.mxu0 0
  %1562 = vmatpush1.bf16.msra.mxu0 0
  %1563 = vmatprep.subr.bf16.mxu0 0
  %1564 = vmatpush1.bf16.msra.mxu0 0
  %1565 = vmatprep.subr.bf16.mxu0 0
  %1566 = vmatpush1.bf16.msra.mxu0 0
  %1567 = vmatprep.subr.bf16.mxu0 0
  %1568 = vmatpush1.bf16.msra.mxu0 0
  %1569 = vmatprep.subr.bf16.mxu0 0
  %1570 = vmatpush1.bf16.msra.mxu0 0
  %1571 = vmatprep.subr.bf16.mxu0 0
  %1572 = vmatpush1.bf16.msra.mxu0 0
  %1573 = vmatprep.mubr.bf16.mxu0 0
  %1574 = vmatmul.mubr.bf16.gmra.mrb[0].mxu0 %v565
  %v1575 = vpop.f32.mrb[0].mxu0
  %v1576 = vadd.f32 0.0, %v1575
  %v1577 = vpop.f32.mrb[0].mxu0
  %v1578 = vpop.f32.mrb[0].mxu0
  %v1579 = vpop.f32.mrb[0].mxu0
  %1580 = vdwg.mxu0
  %v1581 = vadd.f32 %v1480, %v1535
  %v1582 = vadd.f32 %v1481, %v1537
  %v1583 = vadd.f32 %v1482, %v1576
  %1584 = vrot.lane.b32.xlu0 %v989, 92
  %v1585 = vpop.permute.xlu0 %1584
  %1586 = vrot.lane.b32.xlu0 %v990, 92
  %v1587 = vpop.permute.xlu0 %1586
  %1588 = vrot.lane.b32.xlu0 %v991, 92
  %v1589 = vpop.permute.xlu0 %1588
  %v1590 = vsel %vm668, %v1585, %v1587
  %v1591 = vsel %vm668, %v1587, %v1589
  %v1593 = vsel %vm48, %v1590, 0
  %v1596 = vsel %vm48, %v1591, 0
  %v1599 = vsel %vm48, %v1589, 0
  %1601 = vmatprep.subr.bf16.mxu0 %v1596
  %1602 = vmatpush1.bf16.msra.mxu0 %v1593
  %1603 = vmatprep.subr.bf16.mxu0 0
  %1604 = vmatpush1.bf16.msra.mxu0 0
  %1605 = vmatprep.subr.bf16.mxu0 0
  %1606 = vmatpush1.bf16.msra.mxu0 0
  %1607 = vmatprep.subr.bf16.mxu0 0
  %1608 = vmatpush1.bf16.msra.mxu0 0
  %1609 = vmatprep.subr.bf16.mxu0 0
  %1610 = vmatpush1.bf16.msra.mxu0 0
  %1611 = vmatprep.subr.bf16.mxu0 0
  %1612 = vmatpush1.bf16.msra.mxu0 0
  %1613 = vmatprep.subr.bf16.mxu0 0
  %1614 = vmatpush1.bf16.msra.mxu0 0
  %1615 = vmatprep.subr.bf16.mxu0 0
  %1616 = vmatpush1.bf16.msra.mxu0 0
  %1617 = vmatprep.subr.bf16.mxu0 0
  %1618 = vmatpush1.bf16.msra.mxu0 0
  %1619 = vmatprep.subr.bf16.mxu0 0
  %1620 = vmatpush1.bf16.msra.mxu0 0
  %1621 = vmatprep.subr.bf16.mxu0 0
  %1622 = vmatpush1.bf16.msra.mxu0 0
  %1623 = vmatprep.subr.bf16.mxu0 0
  %1624 = vmatpush1.bf16.msra.mxu0 0
  %1625 = vmatprep.subr.bf16.mxu0 0
  %1626 = vmatpush1.bf16.msra.mxu0 0
  %1627 = vmatprep.subr.bf16.mxu0 0
  %1628 = vmatpush1.bf16.msra.mxu0 0
  %1629 = vmatprep.subr.bf16.mxu0 0
  %1630 = vmatpush1.bf16.msra.mxu0 0
  %1631 = vmatprep.subr.bf16.mxu0 0
  %1632 = vmatpush1.bf16.msra.mxu0 0
  %1633 = vmatprep.mubr.bf16.mxu0 0
  %1634 = vmatmul.mubr.bf16.gmra.mrb[0].mxu0 %v672
  %v1635 = vpop.f32.mrb[0].mxu0
  %v1636 = vadd.f32 0.0, %v1635
  %v1637 = vpop.f32.mrb[0].mxu0
  %v1638 = vadd.f32 0.0, %v1637
  %v1639 = vpop.f32.mrb[0].mxu0
  %v1640 = vpop.f32.mrb[0].mxu0
  %1641 = vdwg.mxu0
  %1642 = vmatprep.subr.bf16.mxu0 0
  %1643 = vmatpush1.bf16.msra.mxu0 %v1599
  %1644 = vmatprep.subr.bf16.mxu0 0
  %1645 = vmatpush1.bf16.msra.mxu0 0
  %1646 = vmatprep.subr.bf16.mxu0 0
  %1647 = vmatpush1.bf16.msra.mxu0 0
  %1648 = vmatprep.subr.bf16.mxu0 0
  %1649 = vmatpush1.bf16.msra.mxu0 0
  %1650 = vmatprep.subr.bf16.mxu0 0
  %1651 = vmatpush1.bf16.msra.mxu0 0
  %1652 = vmatprep.subr.bf16.mxu0 0
  %1653 = vmatpush1.bf16.msra.mxu0 0
  %1654 = vmatprep.subr.bf16.mxu0 0
  %1655 = vmatpush1.bf16.msra.mxu0 0
  %1656 = vmatprep.subr.bf16.mxu0 0
  %1657 = vmatpush1.bf16.msra.mxu0 0
  %1658 = vmatprep.subr.bf16.mxu0 0
  %1659 = vmatpush1.bf16.msra.mxu0 0
  %1660 = vmatprep.subr.bf16.mxu0 0
  %1661 = vmatpush1.bf16.msra.mxu0 0
  %1662 = vmatprep.subr.bf16.mxu0 0
  %1663 = vmatpush1.bf16.msra.mxu0 0
  %1664 = vmatprep.subr.bf16.mxu0 0
  %1665 = vmatpush1.bf16.msra.mxu0 0
  %1666 = vmatprep.subr.bf16.mxu0 0
  %1667 = vmatpush1.bf16.msra.mxu0 0
  %1668 = vmatprep.subr.bf16.mxu0 0
  %1669 = vmatpush1.bf16.msra.mxu0 0
  %1670 = vmatprep.subr.bf16.mxu0 0
  %1671 = vmatpush1.bf16.msra.mxu0 0
  %1672 = vmatprep.subr.bf16.mxu0 0
  %1673 = vmatpush1.bf16.msra.mxu0 0
  %1674 = vmatprep.mubr.bf16.mxu0 0
  %1675 = vmatmul.mubr.bf16.gmra.mrb[0].mxu0 %v672
  %v1676 = vpop.f32.mrb[0].mxu0
  %v1677 = vadd.f32 0.0, %v1676
  %v1678 = vpop.f32.mrb[0].mxu0
  %v1679 = vpop.f32.mrb[0].mxu0
  %v1680 = vpop.f32.mrb[0].mxu0
  %1681 = vdwg.mxu0
  %v1682 = vadd.f32 %v1581, %v1636
  %v1683 = vadd.f32 %v1582, %v1638
  %v1684 = vadd.f32 %v1583, %v1677
  %1685 = vrot.lane.b32.xlu0 %v989, 91
  %v1686 = vpop.permute.xlu0 %1685
  %1687 = vrot.lane.b32.xlu0 %v990, 91
  %v1688 = vpop.permute.xlu0 %1687
  %1689 = vrot.lane.b32.xlu0 %v991, 91
  %v1690 = vpop.permute.xlu0 %1689
  %v1691 = vsel %vm775, %v1686, %v1688
  %v1692 = vsel %vm775, %v1688, %v1690
  %v1694 = vsel %vm48, %v1691, 0
  %v1697 = vsel %vm48, %v1692, 0
  %v1700 = vsel %vm48, %v1690, 0
  %1702 = vmatprep.subr.bf16.mxu0 %v1697
  %1703 = vmatpush1.bf16.msra.mxu0 %v1694
  %1704 = vmatprep.subr.bf16.mxu0 0
  %1705 = vmatpush1.bf16.msra.mxu0 0
  %1706 = vmatprep.subr.bf16.mxu0 0
  %1707 = vmatpush1.bf16.msra.mxu0 0
  %1708 = vmatprep.subr.bf16.mxu0 0
  %1709 = vmatpush1.bf16.msra.mxu0 0
  %1710 = vmatprep.subr.bf16.mxu0 0
  %1711 = vmatpush1.bf16.msra.mxu0 0
  %1712 = vmatprep.subr.bf16.mxu0 0
  %1713 = vmatpush1.bf16.msra.mxu0 0
  %1714 = vmatprep.subr.bf16.mxu0 0
  %1715 = vmatpush1.bf16.msra.mxu0 0
  %1716 = vmatprep.subr.bf16.mxu0 0
  %1717 = vmatpush1.bf16.msra.mxu0 0
  %1718 = vmatprep.subr.bf16.mxu0 0
  %1719 = vmatpush1.bf16.msra.mxu0 0
  %1720 = vmatprep.subr.bf16.mxu0 0
  %1721 = vmatpush1.bf16.msra.mxu0 0
  %1722 = vmatprep.subr.bf16.mxu0 0
  %1723 = vmatpush1.bf16.msra.mxu0 0
  %1724 = vmatprep.subr.bf16.mxu0 0
  %1725 = vmatpush1.bf16.msra.mxu0 0
  %1726 = vmatprep.subr.bf16.mxu0 0
  %1727 = vmatpush1.bf16.msra.mxu0 0
  %1728 = vmatprep.subr.bf16.mxu0 0
  %1729 = vmatpush1.bf16.msra.mxu0 0
  %1730 = vmatprep.subr.bf16.mxu0 0
  %1731 = vmatpush1.bf16.msra.mxu0 0
  %1732 = vmatprep.subr.bf16.mxu0 0
  %1733 = vmatpush1.bf16.msra.mxu0 0
  %1734 = vmatprep.mubr.bf16.mxu0 0
  %1735 = vmatmul.mubr.bf16.gmra.mrb[0].mxu0 %v779
  %v1736 = vpop.f32.mrb[0].mxu0
  %v1737 = vadd.f32 0.0, %v1736
  %v1738 = vpop.f32.mrb[0].mxu0
  %v1739 = vadd.f32 0.0, %v1738
  %v1740 = vpop.f32.mrb[0].mxu0
  %v1741 = vpop.f32.mrb[0].mxu0
  %1742 = vdwg.mxu0
  %1743 = vmatprep.subr.bf16.mxu0 0
  %1744 = vmatpush1.bf16.msra.mxu0 %v1700
  %1745 = vmatprep.subr.bf16.mxu0 0
  %1746 = vmatpush1.bf16.msra.mxu0 0
  %1747 = vmatprep.subr.bf16.mxu0 0
  %1748 = vmatpush1.bf16.msra.mxu0 0
  %1749 = vmatprep.subr.bf16.mxu0 0
  %1750 = vmatpush1.bf16.msra.mxu0 0
  %1751 = vmatprep.subr.bf16.mxu0 0
  %1752 = vmatpush1.bf16.msra.mxu0 0
  %1753 = vmatprep.subr.bf16.mxu0 0
  %1754 = vmatpush1.bf16.msra.mxu0 0
  %1755 = vmatprep.subr.bf16.mxu0 0
  %1756 = vmatpush1.bf16.msra.mxu0 0
  %1757 = vmatprep.subr.bf16.mxu0 0
  %1758 = vmatpush1.bf16.msra.mxu0 0
  %1759 = vmatprep.subr.bf16.mxu0 0
  %1760 = vmatpush1.bf16.msra.mxu0 0
  %1761 = vmatprep.subr.bf16.mxu0 0
  %1762 = vmatpush1.bf16.msra.mxu0 0
  %1763 = vmatprep.subr.bf16.mxu0 0
  %1764 = vmatpush1.bf16.msra.mxu0 0
  %1765 = vmatprep.subr.bf16.mxu0 0
  %1766 = vmatpush1.bf16.msra.mxu0 0
  %1767 = vmatprep.subr.bf16.mxu0 0
  %1768 = vmatpush1.bf16.msra.mxu0 0
  %1769 = vmatprep.subr.bf16.mxu0 0
  %1770 = vmatpush1.bf16.msra.mxu0 0
  %1771 = vmatprep.subr.bf16.mxu0 0
  %1772 = vmatpush1.bf16.msra.mxu0 0
  %1773 = vmatprep.subr.bf16.mxu0 0
  %1774 = vmatpush1.bf16.msra.mxu0 0
  %1775 = vmatprep.mubr.bf16.mxu0 0
  %1776 = vmatmul.mubr.bf16.gmra.mrb[0].mxu0 %v779
  %v1777 = vpop.f32.mrb[0].mxu0
  %v1778 = vadd.f32 0.0, %v1777
  %v1779 = vpop.f32.mrb[0].mxu0
  %v1780 = vpop.f32.mrb[0].mxu0
  %v1781 = vpop.f32.mrb[0].mxu0
  %1782 = vdwg.mxu0
  %v1783 = vadd.f32 %v1682, %v1737
  %v1784 = vadd.f32 %v1683, %v1739
  %v1785 = vadd.f32 %v1684, %v1778
  %1786 = vrot.lane.b32.xlu0 %v989, 90
  %v1787 = vpop.permute.xlu0 %1786
  %1788 = vrot.lane.b32.xlu0 %v990, 90
  %v1789 = vpop.permute.xlu0 %1788
  %1790 = vrot.lane.b32.xlu0 %v991, 90
  %v1791 = vpop.permute.xlu0 %1790
  %v1792 = vsel %vm882, %v1787, %v1789
  %v1793 = vsel %vm882, %v1789, %v1791
  %v1795 = vsel %vm48, %v1792, 0
  %v1798 = vsel %vm48, %v1793, 0
  %v1801 = vsel %vm48, %v1791, 0
  %1803 = vmatprep.subr.bf16.mxu0 %v1798
  %1804 = vmatpush1.bf16.msra.mxu0 %v1795
  %1805 = vmatprep.subr.bf16.mxu0 0
  %1806 = vmatpush1.bf16.msra.mxu0 0
  %1807 = vmatprep.subr.bf16.mxu0 0
  %1808 = vmatpush1.bf16.msra.mxu0 0
  %1809 = vmatprep.subr.bf16.mxu0 0
  %1810 = vmatpush1.bf16.msra.mxu0 0
  %1811 = vmatprep.subr.bf16.mxu0 0
  %1812 = vmatpush1.bf16.msra.mxu0 0
  %1813 = vmatprep.subr.bf16.mxu0 0
  %1814 = vmatpush1.bf16.msra.mxu0 0
  %1815 = vmatprep.subr.bf16.mxu0 0
  %1816 = vmatpush1.bf16.msra.mxu0 0
  %1817 = vmatprep.subr.bf16.mxu0 0
  %1818 = vmatpush1.bf16.msra.mxu0 0
  %1819 = vmatprep.subr.bf16.mxu0 0
  %1820 = vmatpush1.bf16.msra.mxu0 0
  %1821 = vmatprep.subr.bf16.mxu0 0
  %1822 = vmatpush1.bf16.msra.mxu0 0
  %1823 = vmatprep.subr.bf16.mxu0 0
  %1824 = vmatpush1.bf16.msra.mxu0 0
  %1825 = vmatprep.subr.bf16.mxu0 0
  %1826 = vmatpush1.bf16.msra.mxu0 0
  %1827 = vmatprep.subr.bf16.mxu0 0
  %1828 = vmatpush1.bf16.msra.mxu0 0
  %1829 = vmatprep.subr.bf16.mxu0 0
  %1830 = vmatpush1.bf16.msra.mxu0 0
  %1831 = vmatprep.subr.bf16.mxu0 0
  %1832 = vmatpush1.bf16.msra.mxu0 0
  %1833 = vmatprep.subr.bf16.mxu0 0
  %1834 = vmatpush1.bf16.msra.mxu0 0
  %1835 = vmatprep.mubr.bf16.mxu0 0
  %1836 = vmatmul.mubr.bf16.gmra.mrb[0].mxu0 %v886
  %v1837 = vpop.f32.mrb[0].mxu0
  %v1838 = vadd.f32 0.0, %v1837
  %v1839 = vpop.f32.mrb[0].mxu0
  %v1840 = vadd.f32 0.0, %v1839
  %v1841 = vpop.f32.mrb[0].mxu0
  %v1842 = vpop.f32.mrb[0].mxu0
  %1843 = vdwg.mxu0
  %1844 = vmatprep.subr.bf16.mxu0 0
  %1845 = vmatpush1.bf16.msra.mxu0 %v1801
  %1846 = vmatprep.subr.bf16.mxu0 0
  %1847 = vmatpush1.bf16.msra.mxu0 0
  %1848 = vmatprep.subr.bf16.mxu0 0
  %1849 = vmatpush1.bf16.msra.mxu0 0
  %1850 = vmatprep.subr.bf16.mxu0 0
  %1851 = vmatpush1.bf16.msra.mxu0 0
  %1852 = vmatprep.subr.bf16.mxu0 0
  %1853 = vmatpush1.bf16.msra.mxu0 0
  %1854 = vmatprep.subr.bf16.mxu0 0
  %1855 = vmatpush1.bf16.msra.mxu0 0
  %1856 = vmatprep.subr.bf16.mxu0 0
  %1857 = vmatpush1.bf16.msra.mxu0 0
  %1858 = vmatprep.subr.bf16.mxu0 0
  %1859 = vmatpush1.bf16.msra.mxu0 0
  %1860 = vmatprep.subr.bf16.mxu0 0
  %1861 = vmatpush1.bf16.msra.mxu0 0
  %1862 = vmatprep.subr.bf16.mxu0 0
  %1863 = vmatpush1.bf16.msra.mxu0 0
  %1864 = vmatprep.subr.bf16.mxu0 0
  %1865 = vmatpush1.bf16.msra.mxu0 0
  %1866 = vmatprep.subr.bf16.mxu0 0
  %1867 = vmatpush1.bf16.msra.mxu0 0
  %1868 = vmatprep.subr.bf16.mxu0 0
  %1869 = vmatpush1.bf16.msra.mxu0 0
  %1870 = vmatprep.subr.bf16.mxu0 0
  %1871 = vmatpush1.bf16.msra.mxu0 0
  %1872 = vmatprep.subr.bf16.mxu0 0
  %1873 = vmatpush1.bf16.msra.mxu0 0
  %1874 = vmatprep.subr.bf16.mxu0 0
  %1875 = vmatpush1.bf16.msra.mxu0 0
  %1876 = vmatprep.mubr.bf16.mxu0 0
  %1877 = vmatmul.mubr.bf16.gmra.mrb[0].mxu0 %v886
  %v1878 = vpop.f32.mrb[0].mxu0
  %v1879 = vadd.f32 0.0, %v1878
  %v1880 = vpop.f32.mrb[0].mxu0
  %v1881 = vpop.f32.mrb[0].mxu0
  %v1882 = vpop.f32.mrb[0].mxu0
  %1883 = vdwg.mxu0
  %v1884 = vadd.f32 %v1783, %v1838
  %v1885 = vadd.f32 %v1784, %v1840
  %v1886 = vadd.f32 %v1785, %v1879
  %v1888 = vlaneseq
  %v1889 = vshrl.u32 %v1888, 7
  %v1890 = vsub.s32 0, %v1889
  %v1891 = vrot.slane %v21, %v1890
  %v1892 = vlaneseq
  %v1893 = vshrl.u32 %v1892, 7
  %v1894 = vsub.s32 1, %v1893
  %v1895 = vrot.slane %v21, %v1894
  %v1896 = vlaneseq
  %v1897 = vshrl.u32 %v1896, 7
  %v1898 = vsub.s32 2, %v1897
  %v1899 = vrot.slane %v21, %v1898
  %v1903 = vmul.f32 %v978, %v1891
  %v1904 = vmul.f32 %v979, %v1895
  %v1905 = vmul.f32 %v980, %v1899
  %v1906 = vadd.f32 %v1903, %v1904
  %vm1907 = vcmask 261120
  %v1908 = vsel %vm1907, %v1905, 0.0
  %v1909 = vadd.f32 %v1906, %v1908
  %1910 = vadd.xlane.f32.xlu0 %v1909
  %v1911 = vpop.xlane.xlu0 %1910
  %v1912 = vadd.f32 %v1911, 0.0
  %v1913 = vmul.f32 %v1884, %v1891
  %v1914 = vmul.f32 %v1885, %v1895
  %v1915 = vmul.f32 %v1886, %v1899
  %v1916 = vadd.f32 %v1913, %v1914
  %v1917 = vsel %vm1907, %v1915, 0.0
  %v1918 = vadd.f32 %v1916, %v1917
  %1919 = vadd.xlane.f32.xlu0 %v1918
  %v1920 = vpop.xlane.xlu0 %1919
  %v1921 = vadd.f32 %v1912, %v1920
  %v1922 = vmul.f32 %v1921, 0.001953125
  %v1923 = vsub.f32 %v978, %v1922
  %v1924 = vsub.f32 %v979, %v1922
  %v1925 = vsub.f32 %v980, %v1922
  %v1926 = vmul.f32 %v1923, %v1891
  %v1927 = vmul.f32 %v1924, %v1895
  %v1928 = vmul.f32 %v1925, %v1899
  %v1929 = vmul.f32 %v1926, %v1926
  %v1930 = vmul.f32 %v1927, %v1927
  %v1931 = vmul.f32 %v1928, %v1928
  %v1932 = vadd.f32 %v1929, %v1930
  %v1933 = vsel %vm1907, %v1931, 0.0
  %v1934 = vadd.f32 %v1932, %v1933
  %1935 = vadd.xlane.f32.xlu0 %v1934
  %v1936 = vpop.xlane.xlu0 %1935
  %v1937 = vadd.f32 %v1936, 0.0
  %v1938 = vsub.f32 %v1884, %v1922
  %v1939 = vsub.f32 %v1885, %v1922
  %v1940 = vsub.f32 %v1886, %v1922
  %v1941 = vmul.f32 %v1938, %v1891
  %v1942 = vmul.f32 %v1939, %v1895
  %v1943 = vmul.f32 %v1940, %v1899
  %v1944 = vmul.f32 %v1941, %v1941
  %v1945 = vmul.f32 %v1942, %v1942
  %v1946 = vmul.f32 %v1943, %v1943
  %v1947 = vadd.f32 %v1944, %v1945
  %v1948 = vsel %vm1907, %v1946, 0.0
  %v1949 = vadd.f32 %v1947, %v1948
  %1950 = vadd.xlane.f32.xlu0 %v1949
  %v1951 = vpop.xlane.xlu0 %1950
  %v1952 = vadd.f32 %v1937, %v1951
  %v1953 = vmul.f32 %v1952, 0.001953125
  %v1954 = vadd.f32 %v1953, 1e-05
  %v1955 = vrsqrt.pop %v1954
  %v1956 = vld [vmem:[%s2] sm:$0xff]
  %v1957 = vmul.f32 %v1956, %v1955
  %v1958 = vld [vmem:[%s3] sm:$0xff]
  %v1959 = vmul.f32 %v1922, %v1957
  %v1960 = vsub.f32 %v1958, %v1959
  %1962 = vset.pattern.permute.xlu0 0
  %1963 = vperm.xlu0 %1962, %v1957
  %v1964 = vpop.permute.xlu0 %1963
  %v1966 = vmul.f32 %v978, %v1964
  %v1967 = vmul.f32 %v979, %v1964
  %v1968 = vmul.f32 %v980, %v1964
  %1970 = vset.pattern.permute.xlu0 0
  %1971 = vperm.xlu0 %1970, %v1960
  %v1972 = vpop.permute.xlu0 %1971
  %v1974 = vadd.f32 %v1966, %v1972
  %v1975 = vadd.f32 %v1967, %v1972
  %v1976 = vadd.f32 %v1968, %v1972
  %v1977 = vmax.f32 %v1974, 0.0
  %v1978 = vmax.f32 %v1975, 0.0
  %v1979 = vmax.f32 %v1976, 0.0
  %1980 = vst [vmem:[%s5] sm:$0xff] %v1977
  %1981 = vst [vmem:[%s5 + $0x8] sm:$0xff] %v1978
  %1982 = vst.msk [vmem:[%s5 + $0x10] sm:$0xff] %vm1907, %v1979
  %v1983 = vmul.f32 %v1884, %v1964
  %v1984 = vmul.f32 %v1885, %v1964
  %v1985 = vmul.f32 %v1886, %v1964
  %v1986 = vadd.f32 %v1983, %v1972
  %v1987 = vadd.f32 %v1984, %v1972
  %v1988 = vadd.f32 %v1985, %v1972
  %v1989 = vmax.f32 %v1986, 0.0
  %v1990 = vmax.f32 %v1987, 0.0
  %v1991 = vmax.f32 %v1988, 0.0
  %s1992 = scalar_lea.vmem %s5, 24
  %1993 = vst [vmem:[%s1992] sm:$0xff] %v1989
  %1994 = vst [vmem:[%s1992 + $0x8] sm:$0xff] %v1990
  %1995 = vst.msk [vmem:[%s1992 + $0x10] sm:$0xff] %vm1907, %v1991
  // Predicated region
  $region22: #{my_cnn_encoder_forward.1} parent=0 // pred_check
    _
  $region23: #{my_cnn_encoder_forward.1} parent=0 // pred_check_branch
    %1997 = sbr.rel (0) target = $region25
  $region24: #{my_cnn_encoder_forward.1} parent=0 // pred_region
    _
  $region25: #{my_cnn_encoder_forward.1} parent=0 // pred_fallthru
    _
  // Predicated region
  $region26: #{my_cnn_encoder_forward.1} parent=0 // pred_check
    _
  $region27: #{my_cnn_encoder_forward.1} parent=0 // pred_check_branch
    %1999 = sbr.rel (0) target = $region29
  $region28: #{my_cnn_encoder_forward.1} parent=0 // pred_region
    _
  $region29: #{my_cnn_encoder_forward.1} parent=0 // pred_fallthru
    _

</llo_original>
